<compile_context>
chip_gen: v5e
topology: v5e:2x2
jax: 0.10.0
libtpu: 0.0.40
codegen_flags: <defaults>
</compile_context>

<pallas_src>
import functools

import jax
import jax.numpy as jnp
from jax.experimental import pallas as pl
from jax.experimental.pallas import tpu as pltpu

EPS = 1e-5
_VMEM_LIMIT = 48 * 1024 * 1024   # <= v7x physical (64 MiB); > 32 MiB default on v5e/v6e


# --------------------------------------------------------------------------- kernels
def _conv1_stats_kernel(x_ref, w1_ref, h1_ref, s_ref, q_ref):
    """1x1 conv on the zero-padded image + bn1 sum/sum-sq accumulation.

    The padded x halo is exactly zero and the conv bias is dropped, so the conv
    output halo is exactly zero too -> plain (unmasked) sums == valid-pixel sums.
    """
    @pl.when(pl.program_id(1) == 0)
    def _init():
        s_ref[...] = jnp.zeros_like(s_ref)
        q_ref[...] = jnp.zeros_like(q_ref)

    h = jnp.dot(w1_ref[...], x_ref[...],
                preferred_element_type=jnp.float32)           # (C1, Lp) f32 acc
    h1_ref[...] = h.astype(h1_ref.dtype)                      # bf16 to HBM
    s_ref[...] += jnp.sum(h, axis=1, keepdims=True)
    q_ref[...] += jnp.sum(h * h, axis=1, keepdims=True)


def _conv2_stats_kernel(h1_ref, mask_ref, sc_ref, sh_ref, w2_ref,
                        h2_ref, s_ref, q_ref, pad_ref, *, K2, Wp, base, L):
    """bn1+relu (masked -> zero halo), 3x3 conv as K2*K2 matmul-accumulates over
    shifted flat slices of a padded VMEM scratch, bn2 statistics."""
    @pl.when(pl.program_id(1) == 0)
    def _init():
        s_ref[...] = jnp.zeros_like(s_ref)
        q_ref[...] = jnp.zeros_like(q_ref)
        pad_ref[...] = jnp.zeros_like(pad_ref)   # zero the slack halo ONCE

    mask = mask_ref[...]                                            # (1, Lp) 0/1 f32
    a = jnp.maximum(h1_ref[...] * sc_ref[...] + sh_ref[...], 0.0) * mask
    # One contiguous lane-dense store of the whole padded activation.
    pad_ref[:, base:base + L] = a.astype(pad_ref.dtype)

    acc = None
    for t in range(K2 * K2):
        ki, kj = t // K2, t % K2
        start = ki * Wp + kj                                        # static lane offset
        tap = pad_ref[:, start:start + L]                           # (C1, Lp) bf16
        part = jnp.dot(w2_ref[t], tap, preferred_element_type=jnp.float32)
        acc = part if acc is None else acc + part                   # (C2, Lp) f32

    h2 = acc * mask                # zero halo; interior is the exact conv2 output
    h2_ref[...] = h2.astype(h2_ref.dtype)
    s_ref[...] += jnp.sum(h2, axis=1, keepdims=True)
    q_ref[...] += jnp.sum(h2 * h2, axis=1, keepdims=True)


def _conv3_stats_kernel(h2_ref, mask_ref, sc_ref, sh_ref, w3_ref,
                        h3_ref, s_ref, q_ref):
    """bn2+relu (masked -> zero halo), 1x1 conv, bn3 statistics."""
    @pl.when(pl.program_id(1) == 0)
    def _init():
        s_ref[...] = jnp.zeros_like(s_ref)
        q_ref[...] = jnp.zeros_like(q_ref)

    a = jnp.maximum(h2_ref[...] * sc_ref[...] + sh_ref[...], 0.0) * mask_ref[...]
    h = jnp.dot(w3_ref[...], a.astype(jnp.bfloat16),
                preferred_element_type=jnp.float32)                 # (C3, Lp) f32
    h3_ref[...] = h.astype(h3_ref.dtype)
    s_ref[...] += jnp.sum(h, axis=1, keepdims=True)
    q_ref[...] += jnp.sum(h * h, axis=1, keepdims=True)


def _bn_residual_relu_kernel(h3_ref, x_ref, sc_ref, sh_ref, out_ref):
    """bn3 + identity residual + relu (halo junk is sliced off in the wrapper)."""
    out_ref[...] = jnp.maximum(
        h3_ref[...] * sc_ref[...] + sh_ref[...] + x_ref[...].astype(jnp.float32),
        0.0)


# --------------------------------------------------------------------------- wrapper
def _fold_bn(sum_, sumsq, count, gamma, beta):
    """Fold training-mode BN (batch stats, biased variance) into scale/shift (f32)."""
    mean = sum_ / count
    var = sumsq / count - mean * mean
    scale = gamma * jax.lax.rsqrt(var + EPS)
    shift = beta - mean * scale
    return scale, shift


@functools.partial(jax.jit, static_argnames=("kernel_size", "stride", "padding"))
def resnet50_basic_block(x_nchw, params, kernel_size, stride, padding):
    """params: PyTorch-shaped tensors (conv weights OIHW, 1-D bn params/biases)."""
    N, Cin, H, W = x_nchw.shape
    C1 = params["w1"].shape[0]
    C2 = params["w2"].shape[0]
    C3 = params["w3"].shape[0]
    K2, P2 = kernel_size[1], padding[1]
    assert stride[0] == 1, "identity residual requires stride 1"
    assert kernel_size[0] == 1 and padding[0] == 0
    assert kernel_size[2] == 1 and padding[2] == 0
    assert K2 == 2 * P2 + 1, "identity residual requires same-size conv2"
    assert C3 == Cin, "identity residual requires outs[2] == in_channel"

    Hp, Wp = H + 2 * P2, W + 2 * P2
    Lp = Hp * Wp
    count = float(N * H * W)                     # BN population = valid pixels only

    # Zero-pad once in the wrapper; all stages then use a lane-dense (C, Hp*Wp)
    # layout with NO per-row scatter/gather inside the kernels.
    x_pad = jnp.pad(x_nchw.astype(jnp.float32),
                    ((0, 0), (0, 0), (P2, P2), (P2, P2)))
    x_bf = x_pad.reshape(N, Cin, Lp).astype(jnp.bfloat16)

    # Grid-invariant valid-pixel mask, resident in VMEM across grid steps.
    valid = jnp.zeros((Hp, Wp), jnp.float32).at[P2:P2 + H, P2:P2 + W].set(1.0)
    mask = valid.reshape(1, Lp)

    # bf16 matmul operands (MXU-native on v5e/v6e/v7x); accumulation stays f32.
    w1 = params["w1"].reshape(C1, Cin).astype(jnp.bfloat16)
    # (K2*K2, C2, C1): tap-major so the kernel statically indexes w2r[t].
    w2r = jnp.transpose(params["w2"], (2, 3, 0, 1)).reshape(K2 * K2, C2, C1)
    w2r = w2r.astype(jnp.bfloat16)
    w3 = params["w3"].reshape(C3, C2).astype(jnp.bfloat16)
    # conv biases b1/b2/b3 cancel exactly inside training-mode BatchNorm -> dropped.
    col = lambda v: v.reshape(-1, 1).astype(jnp.float32)
    g1, be1 = col(params["g1"]), col(params["be1"])
    g2, be2 = col(params["g2"]), col(params["be2"])
    g3, be3 = col(params["g3"]), col(params["be3"])

    # Stats stages: (nsplit, N//nsplit) grid, leading axis 'parallel' (v7x dual-TC),
    # trailing batch axis 'arbitrary' with per-split resident stat accumulators.
    nsplit = 2 if (N % 2 == 0 and N >= 2) else 1
    nper = N // nsplit
    grid = (nsplit, nper)

    img = lambda c: pl.BlockSpec((None, c, Lp), lambda s, n: (s * nper + n, 0, 0))
    rep = lambda *shape: pl.BlockSpec(shape, lambda s, n: (0,) * len(shape))
    stat_spec = lambda c: pl.BlockSpec((None, c, 1), lambda s, n: (s, 0, 0))
    stat_shape = lambda c: jax.ShapeDtypeStruct((nsplit, c, 1), jnp.float32)
    act = lambda c: jax.ShapeDtypeStruct((N, c, Lp), jnp.bfloat16)

    acc_params = pltpu.CompilerParams(
        dimension_semantics=("parallel", "arbitrary"), vmem_limit_bytes=_VMEM_LIMIT)
    par_params = pltpu.CompilerParams(
        dimension_semantics=("parallel",), vmem_limit_bytes=_VMEM_LIMIT)

    # ---- stage 1: conv1 (1x1) + bn1 statistics ----
    h1, s1p, q1p = pl.pallas_call(
        _conv1_stats_kernel,
        grid=grid,
        in_specs=[img(Cin), rep(C1, Cin)],
        out_specs=(img(C1), stat_spec(C1), stat_spec(C1)),
        out_shape=(act(C1), stat_shape(C1), stat_shape(C1)),
        compiler_params=acc_params,
    )(x_bf, w1)
    sc1, sh1 = _fold_bn(s1p.sum(0), q1p.sum(0), count, g1, be1)

    # ---- stage 2: bn1+relu, conv2 (3x3), bn2 statistics ----
    base = P2 * Wp + P2
    pad_len = Lp + 2 * base                       # slack so every tap slice fits
    h2, s2p, q2p = pl.pallas_call(
        functools.partial(_conv2_stats_kernel, K2=K2, Wp=Wp, base=base, L=Lp),
        grid=grid,
        in_specs=[img(C1), rep(1, Lp), rep(C1, 1), rep(C1, 1),
                  rep(K2 * K2, C2, C1)],
        out_specs=(img(C2), stat_spec(C2), stat_spec(C2)),
        out_shape=(act(C2), stat_shape(C2), stat_shape(C2)),
        scratch_shapes=[pltpu.VMEM((C1, pad_len), jnp.bfloat16)],
        compiler_params=acc_params,
    )(h1, mask, sc1, sh1, w2r)
    sc2, sh2 = _fold_bn(s2p.sum(0), q2p.sum(0), count, g2, be2)

    # ---- stage 3: bn2+relu, conv3 (1x1), bn3 statistics ----
    h3, s3p, q3p = pl.pallas_call(
        _conv3_stats_kernel,
        grid=grid,
        in_specs=[img(C2), rep(1, Lp), rep(C2, 1), rep(C2, 1), rep(C3, C2)],
        out_specs=(img(C3), stat_spec(C3), stat_spec(C3)),
        out_shape=(act(C3), stat_shape(C3), stat_shape(C3)),
        compiler_params=acc_params,
    )(h2, mask, sc2, sh2, w3)
    sc3, sh3 = _fold_bn(s3p.sum(0), q3p.sum(0), count, g3, be3)

    # ---- stage 4: bn3 + identity residual + relu (independent per image) ----
    img1 = lambda c: pl.BlockSpec((None, c, Lp), lambda n: (n, 0, 0))
    rep1 = lambda *shape: pl.BlockSpec(shape, lambda n: (0,) * len(shape))
    out_p = pl.pallas_call(
        _bn_residual_relu_kernel,
        grid=(N,),
        in_specs=[img1(C3), img1(Cin), rep1(C3, 1), rep1(C3, 1)],
        out_specs=img1(C3),
        out_shape=jax.ShapeDtypeStruct((N, C3, Lp), jnp.float32),
        compiler_params=par_params,
    )(h3, x_bf, sc3, sh3)

    # Strip the zero-padding halo with one wrapper-side slice.
    out = out_p.reshape(N, C3, Hp, Wp)[:, :, P2:P2 + H, P2:P2 + W]
    return out


# --------------------------------------------------------------------------- reference
def _reference(x, params, kernel_size, padding):
    """Pure-JAX f32 NCHW reference mirroring the PyTorch forward (train-mode BN)."""
    def conv(h, w, b, p):
        y = jax.lax.conv_general_dilated(
            h, w, window_strides=(1, 1), padding=[(p, p), (p, p)],
            dimension_numbers=("NCHW", "OIHW", "NCHW"))
        return y + b[None, :, None, None]

    def bn(h, g, be):
        mean = h.mean(axis=(0, 2, 3), keepdims=True)
        var = ((h - mean) ** 2).mean(axis=(0, 2, 3), keepdims=True)
        return (h - mean) / jnp.sqrt(var + EPS) * g[None, :, None, None] \
               + be[None, :, None, None]

    h = jax.nn.relu(bn(conv(x, params["w1"], params["b1"], padding[0]),
                       params["g1"], params["be1"]))
    h = jax.nn.relu(bn(conv(h, params["w2"], params["b2"], padding[1]),
                       params["g2"], params["be2"]))
    h = bn(conv(h, params["w3"], params["b3"], padding[2]),
           params["g3"], params["be3"])
    return jax.nn.relu(h + x)


if __name__ == "__main__":
    # Config consistent with the module:
    # in_channel=4, outs=[8, 8, 4], kernel_size=[1, 3, 1], stride=[1], padding=[0, 1, 0]
    N, Cin, H, W = 2, 4, 16, 16
    outs = (8, 8, 4)
    kernel_size = (1, 3, 1)
    stride = (1,)
    padding = (0, 1, 0)

    key = jax.random.PRNGKey(0)
    keys = jax.random.split(key, 16)

    def nrm(k, shape, scale=0.1):
        return scale * jax.random.normal(k, shape, dtype=jnp.float32)

    params = {
        # conv weights in PyTorch OIHW layout, biases 1-D
        "w1": nrm(keys[0], (outs[0], Cin, kernel_size[0], kernel_size[0])),
        "b1": nrm(keys[1], (outs[0],)),
        "w2": nrm(keys[2], (outs[1], outs[0], kernel_size[1], kernel_size[1])),
        "b2": nrm(keys[3], (outs[1],)),
        "w3": nrm(keys[4], (outs[2], outs[1], kernel_size[2], kernel_size[2])),
        "b3": nrm(keys[5], (outs[2],)),
        # BatchNorm affine params
        "g1": 1.0 + nrm(keys[6], (outs[0],)), "be1": nrm(keys[7], (outs[0],)),
        "g2": 1.0 + nrm(keys[8], (outs[1],)), "be2": nrm(keys[9], (outs[1],)),
        "g3": 1.0 + nrm(keys[10], (outs[2],)), "be3": nrm(keys[11], (outs[2],)),
    }

    x = jax.random.normal(keys[12], (N, Cin, H, W), dtype=jnp.float32)

    out = resnet50_basic_block(x, params, kernel_size, stride, padding)
    out = jax.block_until_ready(out)

    ref = jax.block_until_ready(_reference(x, params, kernel_size, padding))
    assert out.shape == (N, Cin, H, W)
    err = float(jnp.max(jnp.abs(out - ref)))
    # Tolerance accounts for bf16 MXU operands + bf16 HBM intermediates vs. the
    # pure-f32 reference (BN scale/shift and stats are kept in f32).
    assert jnp.allclose(out, ref, rtol=7e-2, atol=7e-2), f"max abs err {err}"

    print("KERNEL_OK")
</pallas_src>

<mosaic_0001>
module attributes {stable_mosaic.version = 11 : i64} {
  func.func @_conv1_stats_kernel(%arg0: i32, %arg1: i32, %arg2: memref<1x4x324xbf16, #tpu.memory_space<vmem>>, %arg3: memref<8x4xbf16, #tpu.memory_space<vmem>>, %arg4: memref<1x8x324xbf16, #tpu.memory_space<vmem>>, %arg5: memref<1x8x1xf32, #tpu.memory_space<vmem>>, %arg6: memref<1x8x1xf32, #tpu.memory_space<vmem>>) attributes {dimension_semantics = [#tpu.dimension_semantics<parallel>, #tpu.dimension_semantics<arbitrary>], iteration_bounds = array<i64: 2, 1>, scalar_prefetch = 0 : i64, scratch_operands = 0 : i64, tpu.core_type = #tpu.core_type<tc>, window_params = [{transform_indices = @transform_0, window_bounds = array<i64: 1, 4, 324>}, {pipeline_mode = #tpu.pipeline_mode<synchronous>, transform_indices = @transform_1, window_bounds = array<i64: 8, 4>}, {transform_indices = @transform_2, window_bounds = array<i64: 1, 8, 324>}, {transform_indices = @transform_3, window_bounds = array<i64: 1, 8, 1>}, {transform_indices = @transform_4, window_bounds = array<i64: 1, 8, 1>}]} {
    %c0_i32 = arith.constant 0 : i32
    %0 = arith.cmpi eq, %arg1, %c0_i32 : i32
    %1 = arith.extui %0 : i1 to i32
    %c0_i32_0 = arith.constant 0 : i32
    %2 = arith.cmpi ne, %1, %c0_i32_0 : i32
    scf.if %2 {
      %cst_22 = arith.constant 0.000000e+00 : f32
      %28 = vector.broadcast %cst_22 : f32 to vector<8x1xf32>
      %c0_23 = arith.constant 0 : index
      %c0_24 = arith.constant 0 : index
      %c0_25 = arith.constant 0 : index
      %29 = vector.load %arg5[%c0_23, %c0_24, %c0_25] : memref<1x8x1xf32, #tpu.memory_space<vmem>>, vector<1x8x1xf32>
      %30 = vector.shape_cast %29 : vector<1x8x1xf32> to vector<8x1xf32>
      %31 = vector.shape_cast %28 : vector<8x1xf32> to vector<1x8x1xf32>
      tpu.vector_store %arg5[%c0_23, %c0_24, %c0_25], %31 {strides = array<i32>} : memref<1x8x1xf32, #tpu.memory_space<vmem>>, vector<1x8x1xf32>,
      %cst_26 = arith.constant 0.000000e+00 : f32
      %32 = vector.broadcast %cst_26 : f32 to vector<8x1xf32>
      %c0_27 = arith.constant 0 : index
      %c0_28 = arith.constant 0 : index
      %c0_29 = arith.constant 0 : index
      %33 = vector.load %arg6[%c0_27, %c0_28, %c0_29] : memref<1x8x1xf32, #tpu.memory_space<vmem>>, vector<1x8x1xf32>
      %34 = vector.shape_cast %33 : vector<1x8x1xf32> to vector<8x1xf32>
      %35 = vector.shape_cast %32 : vector<8x1xf32> to vector<1x8x1xf32>
      tpu.vector_store %arg6[%c0_27, %c0_28, %c0_29], %35 {strides = array<i32>} : memref<1x8x1xf32, #tpu.memory_space<vmem>>, vector<1x8x1xf32>,
    } else {
    }
    %c0 = arith.constant 0 : index
    %c0_1 = arith.constant 0 : index
    %3 = vector.load %arg3[%c0, %c0_1] : memref<8x4xbf16, #tpu.memory_space<vmem>>, vector<8x4xbf16>
    %c0_2 = arith.constant 0 : index
    %c0_3 = arith.constant 0 : index
    %c0_4 = arith.constant 0 : index
    %4 = vector.load %arg2[%c0_2, %c0_3, %c0_4] : memref<1x4x324xbf16, #tpu.memory_space<vmem>>, vector<1x4x324xbf16>
    %5 = vector.shape_cast %4 : vector<1x4x324xbf16> to vector<4x324xbf16>
    %cst = arith.constant dense<0.000000e+00> : vector<8x324xf32>
    %6 = tpu.matmul %3, %5, %cst {dimension_numbers = #tpu.dot_dimension_numbers<[1], [0], [0], [1], [0, 0, 1, 1], [], []>} : vector<8x4xbf16>, vector<4x324xbf16>, vector<8x324xf32> -> vector<8x324xf32>
    %7 = arith.truncf %6 : vector<8x324xf32> to vector<8x324xbf16>
    %c0_5 = arith.constant 0 : index
    %c0_6 = arith.constant 0 : index
    %c0_7 = arith.constant 0 : index
    %8 = vector.load %arg4[%c0_5, %c0_6, %c0_7] : memref<1x8x324xbf16, #tpu.memory_space<vmem>>, vector<1x8x324xbf16>
    %9 = vector.shape_cast %8 : vector<1x8x324xbf16> to vector<8x324xbf16>
    %10 = vector.shape_cast %7 : vector<8x324xbf16> to vector<1x8x324xbf16>
    tpu.vector_store %arg4[%c0_5, %c0_6, %c0_7], %10 {strides = array<i32>} : memref<1x8x324xbf16, #tpu.memory_space<vmem>>, vector<1x8x324xbf16>,
    %c0_8 = arith.constant 0 : index
    %c0_9 = arith.constant 0 : index
    %c0_10 = arith.constant 0 : index
    %11 = vector.load %arg5[%c0_8, %c0_9, %c0_10] : memref<1x8x1xf32, #tpu.memory_space<vmem>>, vector<1x8x1xf32>
    %12 = vector.shape_cast %11 : vector<1x8x1xf32> to vector<8x1xf32>
    %cst_11 = arith.constant dense<0.000000e+00> : vector<8xf32>
    %13 = vector.multi_reduction <add>, %6, %cst_11 [1] : vector<8x324xf32> to vector<8xf32>
    %14 = vector.shape_cast %13 : vector<8xf32> to vector<8x1xf32>
    %15 = arith.addf %12, %14 : vector<8x1xf32>
    %c0_12 = arith.constant 0 : index
    %c0_13 = arith.constant 0 : index
    %c0_14 = arith.constant 0 : index
    %16 = vector.load %arg5[%c0_12, %c0_13, %c0_14] : memref<1x8x1xf32, #tpu.memory_space<vmem>>, vector<1x8x1xf32>
    %17 = vector.shape_cast %16 : vector<1x8x1xf32> to vector<8x1xf32>
    %18 = vector.shape_cast %15 : vector<8x1xf32> to vector<1x8x1xf32>
    tpu.vector_store %arg5[%c0_12, %c0_13, %c0_14], %18 {strides = array<i32>} : memref<1x8x1xf32, #tpu.memory_space<vmem>>, vector<1x8x1xf32>,
    %c0_15 = arith.constant 0 : index
    %c0_16 = arith.constant 0 : index
    %c0_17 = arith.constant 0 : index
    %19 = vector.load %arg6[%c0_15, %c0_16, %c0_17] : memref<1x8x1xf32, #tpu.memory_space<vmem>>, vector<1x8x1xf32>
    %20 = vector.shape_cast %19 : vector<1x8x1xf32> to vector<8x1xf32>
    %21 = arith.mulf %6, %6 : vector<8x324xf32>
    %cst_18 = arith.constant dense<0.000000e+00> : vector<8xf32>
    %22 = vector.multi_reduction <add>, %21, %cst_18 [1] : vector<8x324xf32> to vector<8xf32>
    %23 = vector.shape_cast %22 : vector<8xf32> to vector<8x1xf32>
    %24 = arith.addf %20, %23 : vector<8x1xf32>
    %c0_19 = arith.constant 0 : index
    %c0_20 = arith.constant 0 : index
    %c0_21 = arith.constant 0 : index
    %25 = vector.load %arg6[%c0_19, %c0_20, %c0_21] : memref<1x8x1xf32, #tpu.memory_space<vmem>>, vector<1x8x1xf32>
    %26 = vector.shape_cast %25 : vector<1x8x1xf32> to vector<8x1xf32>
    %27 = vector.shape_cast %24 : vector<8x1xf32> to vector<1x8x1xf32>
    tpu.vector_store %arg6[%c0_19, %c0_20, %c0_21], %27 {strides = array<i32>} : memref<1x8x1xf32, #tpu.memory_space<vmem>>, vector<1x8x1xf32>,
    return
  }
  func.func @transform_0(%arg0: i32, %arg1: i32) -> (i32, i32, i32) {
    %c1_i32 = arith.constant 1 : i32
    %0 = arith.muli %arg0, %c1_i32 : i32
    %1 = arith.addi %0, %arg1 : i32
    %c0_i32 = arith.constant 0 : i32
    %c0_i32_0 = arith.constant 0 : i32
    %c0_i32_1 = arith.constant 0 : i32
    return %1, %c0_i32, %c0_i32_0 : i32, i32, i32
  }
  func.func @transform_1(%arg0: i32, %arg1: i32) -> (i32, i32) {
    %c0_i32 = arith.constant 0 : i32
    %c0_i32_0 = arith.constant 0 : i32
    %c0_i32_1 = arith.constant 0 : i32
    return %c0_i32, %c0_i32_0 : i32, i32
  }
  func.func @transform_2(%arg0: i32, %arg1: i32) -> (i32, i32, i32) {
    %c1_i32 = arith.constant 1 : i32
    %0 = arith.muli %arg0, %c1_i32 : i32
    %1 = arith.addi %0, %arg1 : i32
    %c0_i32 = arith.constant 0 : i32
    %c0_i32_0 = arith.constant 0 : i32
    %c0_i32_1 = arith.constant 0 : i32
    return %1, %c0_i32, %c0_i32_0 : i32, i32, i32
  }
  func.func @transform_3(%arg0: i32, %arg1: i32) -> (i32, i32, i32) {
    %c0_i32 = arith.constant 0 : i32
    %c0_i32_0 = arith.constant 0 : i32
    %c0_i32_1 = arith.constant 0 : i32
    return %arg0, %c0_i32, %c0_i32_0 : i32, i32, i32
  }
  func.func @transform_4(%arg0: i32, %arg1: i32) -> (i32, i32, i32) {
    %c0_i32 = arith.constant 0 : i32
    %c0_i32_0 = arith.constant 0 : i32
    %c0_i32_1 = arith.constant 0 : i32
    return %arg0, %c0_i32, %c0_i32_0 : i32, i32, i32
  }
}

module attributes {stable_mosaic.version = 11 : i64} {
  func.func @_conv2_stats_kernel(%arg0: i32, %arg1: i32, %arg2: memref<1x8x324xbf16, #tpu.memory_space<vmem>>, %arg3: memref<1x324xf32, #tpu.memory_space<vmem>>, %arg4: memref<8x1xf32, #tpu.memory_space<vmem>>, %arg5: memref<8x1xf32, #tpu.memory_space<vmem>>, %arg6: memref<9x8x8xbf16, #tpu.memory_space<vmem>>, %arg7: memref<1x8x324xbf16, #tpu.memory_space<vmem>>, %arg8: memref<1x8x1xf32, #tpu.memory_space<vmem>>, %arg9: memref<1x8x1xf32, #tpu.memory_space<vmem>>, %arg10: memref<8x362xbf16, #tpu.memory_space<vmem>>) attributes {dimension_semantics = [#tpu.dimension_semantics<parallel>, #tpu.dimension_semantics<arbitrary>], iteration_bounds = array<i64: 2, 1>, scalar_prefetch = 0 : i64, scratch_operands = 1 : i64, tpu.core_type = #tpu.core_type<tc>, window_params = [{transform_indices = @transform_0, window_bounds = array<i64: 1, 8, 324>}, {pipeline_mode = #tpu.pipeline_mode<synchronous>, transform_indices = @transform_1, window_bounds = array<i64: 1, 324>}, {pipeline_mode = #tpu.pipeline_mode<synchronous>, transform_indices = @transform_2, window_bounds = array<i64: 8, 1>}, {pipeline_mode = #tpu.pipeline_mode<synchronous>, transform_indices = @transform_3, window_bounds = array<i64: 8, 1>}, {pipeline_mode = #tpu.pipeline_mode<synchronous>, transform_indices = @transform_4, window_bounds = array<i64: 9, 8, 8>}, {transform_indices = @transform_5, window_bounds = array<i64: 1, 8, 324>}, {transform_indices = @transform_6, window_bounds = array<i64: 1, 8, 1>}, {transform_indices = @transform_7, window_bounds = array<i64: 1, 8, 1>}]} {
    %c0_i32 = arith.constant 0 : i32
    %0 = arith.cmpi eq, %arg1, %c0_i32 : i32
    %1 = arith.extui %0 : i1 to i32
    %c0_i32_0 = arith.constant 0 : i32
    %2 = arith.cmpi ne, %1, %c0_i32_0 : i32
    scf.if %2 {
      %cst_68 = arith.constant 0.000000e+00 : f32
      %86 = vector.broadcast %cst_68 : f32 to vector<8x1xf32>
      %c0_69 = arith.constant 0 : index
      %c0_70 = arith.constant 0 : index
      %c0_71 = arith.constant 0 : index
      %87 = vector.load %arg8[%c0_69, %c0_70, %c0_71] : memref<1x8x1xf32, #tpu.memory_space<vmem>>, vector<1x8x1xf32>
      %88 = vector.shape_cast %87 : vector<1x8x1xf32> to vector<8x1xf32>
      %89 = vector.shape_cast %86 : vector<8x1xf32> to vector<1x8x1xf32>
      tpu.vector_store %arg8[%c0_69, %c0_70, %c0_71], %89 {strides = array<i32>} : memref<1x8x1xf32, #tpu.memory_space<vmem>>, vector<1x8x1xf32>,
      %cst_72 = arith.constant 0.000000e+00 : f32
      %90 = vector.broadcast %cst_72 : f32 to vector<8x1xf32>
      %c0_73 = arith.constant 0 : index
      %c0_74 = arith.constant 0 : index
      %c0_75 = arith.constant 0 : index
      %91 = vector.load %arg9[%c0_73, %c0_74, %c0_75] : memref<1x8x1xf32, #tpu.memory_space<vmem>>, vector<1x8x1xf32>
      %92 = vector.shape_cast %91 : vector<1x8x1xf32> to vector<8x1xf32>
      %93 = vector.shape_cast %90 : vector<8x1xf32> to vector<1x8x1xf32>
      tpu.vector_store %arg9[%c0_73, %c0_74, %c0_75], %93 {strides = array<i32>} : memref<1x8x1xf32, #tpu.memory_space<vmem>>, vector<1x8x1xf32>,
      %cst_76 = arith.constant 0.000000e+00 : bf16
      %94 = vector.broadcast %cst_76 : bf16 to vector<8x362xbf16>
      %c0_77 = arith.constant 0 : index
      %c0_78 = arith.constant 0 : index
      %95 = vector.load %arg10[%c0_77, %c0_78] : memref<8x362xbf16, #tpu.memory_space<vmem>>, vector<8x362xbf16>
      tpu.vector_store %arg10[%c0_77, %c0_78], %94 {strides = array<i32>} : memref<8x362xbf16, #tpu.memory_space<vmem>>, vector<8x362xbf16>,
    } else {
    }
    %c0 = arith.constant 0 : index
    %c0_1 = arith.constant 0 : index
    %3 = vector.load %arg3[%c0, %c0_1] : memref<1x324xf32, #tpu.memory_space<vmem>>, vector<1x324xf32>
    %c0_2 = arith.constant 0 : index
    %c0_3 = arith.constant 0 : index
    %c0_4 = arith.constant 0 : index
    %4 = vector.load %arg2[%c0_2, %c0_3, %c0_4] : memref<1x8x324xbf16, #tpu.memory_space<vmem>>, vector<1x8x324xbf16>
    %5 = vector.shape_cast %4 : vector<1x8x324xbf16> to vector<8x324xbf16>
    %c0_5 = arith.constant 0 : index
    %c0_6 = arith.constant 0 : index
    %6 = vector.load %arg4[%c0_5, %c0_6] : memref<8x1xf32, #tpu.memory_space<vmem>>, vector<8x1xf32>
    %7 = arith.extf %5 : vector<8x324xbf16> to vector<8x324xf32>
    %8 = vector.broadcast %6 : vector<8x1xf32> to vector<8x324xf32>
    %9 = arith.mulf %7, %8 : vector<8x324xf32>
    %c0_7 = arith.constant 0 : index
    %c0_8 = arith.constant 0 : index
    %10 = vector.load %arg5[%c0_7, %c0_8] : memref<8x1xf32, #tpu.memory_space<vmem>>, vector<8x1xf32>
    %11 = vector.broadcast %10 : vector<8x1xf32> to vector<8x324xf32>
    %12 = arith.addf %9, %11 : vector<8x324xf32>
    %cst = arith.constant 0.000000e+00 : f32
    %13 = vector.broadcast %cst : f32 to vector<8x324xf32>
    %14 = arith.maximumf %12, %13 : vector<8x324xf32>
    %15 = vector.broadcast %3 : vector<1x324xf32> to vector<8x324xf32>
    %16 = arith.mulf %14, %15 : vector<8x324xf32>
    %17 = arith.truncf %16 : vector<8x324xf32> to vector<8x324xbf16>
    %c0_9 = arith.constant 0 : index
    %c19 = arith.constant 19 : index
    %18 = vector.load %arg10[%c0_9, %c19] : memref<8x362xbf16, #tpu.memory_space<vmem>>, vector<8x324xbf16>
    tpu.vector_store %arg10[%c0_9, %c19], %17 {strides = array<i32>} : memref<8x362xbf16, #tpu.memory_space<vmem>>, vector<8x324xbf16>,
    %c0_10 = arith.constant 0 : index
    %c0_11 = arith.constant 0 : index
    %19 = vector.load %arg10[%c0_10, %c0_11] : memref<8x362xbf16, #tpu.memory_space<vmem>>, vector<8x324xbf16>
    %c0_12 = arith.constant 0 : index
    %c0_13 = arith.constant 0 : index
    %c0_14 = arith.constant 0 : index
    %20 = vector.load %arg6[%c0_12, %c0_13, %c0_14] : memref<9x8x8xbf16, #tpu.memory_space<vmem>>, vector<1x8x8xbf16>
    %21 = vector.shape_cast %20 : vector<1x8x8xbf16> to vector<8x8xbf16>
    %cst_15 = arith.constant dense<0.000000e+00> : vector<8x324xf32>
    %22 = tpu.matmul %21, %19, %cst_15 {dimension_numbers = #tpu.dot_dimension_numbers<[1], [0], [0], [1], [0, 0, 1, 1], [], []>} : vector<8x8xbf16>, vector<8x324xbf16>, vector<8x324xf32> -> vector<8x324xf32>
    %c0_16 = arith.constant 0 : index
    %c1 = arith.constant 1 : index
    %23 = vector.load %arg10[%c0_16, %c1] : memref<8x362xbf16, #tpu.memory_space<vmem>>, vector<8x324xbf16>
    %c1_17 = arith.constant 1 : index
    %c0_18 = arith.constant 0 : index
    %c0_19 = arith.constant 0 : index
    %24 = vector.load %arg6[%c1_17, %c0_18, %c0_19] : memref<9x8x8xbf16, #tpu.memory_space<vmem>>, vector<1x8x8xbf16>
    %25 = vector.shape_cast %24 : vector<1x8x8xbf16> to vector<8x8xbf16>
    %cst_20 = arith.constant dense<0.000000e+00> : vector<8x324xf32>
    %26 = tpu.matmul %25, %23, %cst_20 {dimension_numbers = #tpu.dot_dimension_numbers<[1], [0], [0], [1], [0, 0, 1, 1], [], []>} : vector<8x8xbf16>, vector<8x324xbf16>, vector<8x324xf32> -> vector<8x324xf32>
    %27 = arith.addf %22, %26 : vector<8x324xf32>
    %c0_21 = arith.constant 0 : index
    %c2 = arith.constant 2 : index
    %28 = vector.load %arg10[%c0_21, %c2] : memref<8x362xbf16, #tpu.memory_space<vmem>>, vector<8x324xbf16>
    %c2_22 = arith.constant 2 : index
    %c0_23 = arith.constant 0 : index
    %c0_24 = arith.constant 0 : index
    %29 = vector.load %arg6[%c2_22, %c0_23, %c0_24] : memref<9x8x8xbf16, #tpu.memory_space<vmem>>, vector<1x8x8xbf16>
    %30 = vector.shape_cast %29 : vector<1x8x8xbf16> to vector<8x8xbf16>
    %cst_25 = arith.constant dense<0.000000e+00> : vector<8x324xf32>
    %31 = tpu.matmul %30, %28, %cst_25 {dimension_numbers = #tpu.dot_dimension_numbers<[1], [0], [0], [1], [0, 0, 1, 1], [], []>} : vector<8x8xbf16>, vector<8x324xbf16>, vector<8x324xf32> -> vector<8x324xf32>
    %32 = arith.addf %27, %31 : vector<8x324xf32>
    %c0_26 = arith.constant 0 : index
    %c18 = arith.constant 18 : index
    %33 = vector.load %arg10[%c0_26, %c18] : memref<8x362xbf16, #tpu.memory_space<vmem>>, vector<8x324xbf16>
    %c3 = arith.constant 3 : index
    %c0_27 = arith.constant 0 : index
    %c0_28 = arith.constant 0 : index
    %34 = vector.load %arg6[%c3, %c0_27, %c0_28] : memref<9x8x8xbf16, #tpu.memory_space<vmem>>, vector<1x8x8xbf16>
    %35 = vector.shape_cast %34 : vector<1x8x8xbf16> to vector<8x8xbf16>
    %cst_29 = arith.constant dense<0.000000e+00> : vector<8x324xf32>
    %36 = tpu.matmul %35, %33, %cst_29 {dimension_numbers = #tpu.dot_dimension_numbers<[1], [0], [0], [1], [0, 0, 1, 1], [], []>} : vector<8x8xbf16>, vector<8x324xbf16>, vector<8x324xf32> -> vector<8x324xf32>
    %37 = arith.addf %32, %36 : vector<8x324xf32>
    %c0_30 = arith.constant 0 : index
    %c19_31 = arith.constant 19 : index
    %38 = vector.load %arg10[%c0_30, %c19_31] : memref<8x362xbf16, #tpu.memory_space<vmem>>, vector<8x324xbf16>
    %c4 = arith.constant 4 : index
    %c0_32 = arith.constant 0 : index
    %c0_33 = arith.constant 0 : index
    %39 = vector.load %arg6[%c4, %c0_32, %c0_33] : memref<9x8x8xbf16, #tpu.memory_space<vmem>>, vector<1x8x8xbf16>
    %40 = vector.shape_cast %39 : vector<1x8x8xbf16> to vector<8x8xbf16>
    %cst_34 = arith.constant dense<0.000000e+00> : vector<8x324xf32>
    %41 = tpu.matmul %40, %38, %cst_34 {dimension_numbers = #tpu.dot_dimension_numbers<[1], [0], [0], [1], [0, 0, 1, 1], [], []>} : vector<8x8xbf16>, vector<8x324xbf16>, vector<8x324xf32> -> vector<8x324xf32>
    %42 = arith.addf %37, %41 : vector<8x324xf32>
    %c0_35 = arith.constant 0 : index
    %c20 = arith.constant 20 : index
    %43 = vector.load %arg10[%c0_35, %c20] : memref<8x362xbf16, #tpu.memory_space<vmem>>, vector<8x324xbf16>
    %c5 = arith.constant 5 : index
    %c0_36 = arith.constant 0 : index
    %c0_37 = arith.constant 0 : index
    %44 = vector.load %arg6[%c5, %c0_36, %c0_37] : memref<9x8x8xbf16, #tpu.memory_space<vmem>>, vector<1x8x8xbf16>
    %45 = vector.shape_cast %44 : vector<1x8x8xbf16> to vector<8x8xbf16>
    %cst_38 = arith.constant dense<0.000000e+00> : vector<8x324xf32>
    %46 = tpu.matmul %45, %43, %cst_38 {dimension_numbers = #tpu.dot_dimension_numbers<[1], [0], [0], [1], [0, 0, 1, 1], [], []>} : vector<8x8xbf16>, vector<8x324xbf16>, vector<8x324xf32> -> vector<8x324xf32>
    %47 = arith.addf %42, %46 : vector<8x324xf32>
    %c0_39 = arith.constant 0 : index
    %c36 = arith.constant 36 : index
    %48 = vector.load %arg10[%c0_39, %c36] : memref<8x362xbf16, #tpu.memory_space<vmem>>, vector<8x324xbf16>
    %c6 = arith.constant 6 : index
    %c0_40 = arith.constant 0 : index
    %c0_41 = arith.constant 0 : index
    %49 = vector.load %arg6[%c6, %c0_40, %c0_41] : memref<9x8x8xbf16, #tpu.memory_space<vmem>>, vector<1x8x8xbf16>
    %50 = vector.shape_cast %49 : vector<1x8x8xbf16> to vector<8x8xbf16>
    %cst_42 = arith.constant dense<0.000000e+00> : vector<8x324xf32>
    %51 = tpu.matmul %50, %48, %cst_42 {dimension_numbers = #tpu.dot_dimension_numbers<[1], [0], [0], [1], [0, 0, 1, 1], [], []>} : vector<8x8xbf16>, vector<8x324xbf16>, vector<8x324xf32> -> vector<8x324xf32>
    %52 = arith.addf %47, %51 : vector<8x324xf32>
    %c0_43 = arith.constant 0 : index
    %c37 = arith.constant 37 : index
    %53 = vector.load %arg10[%c0_43, %c37] : memref<8x362xbf16, #tpu.memory_space<vmem>>, vector<8x324xbf16>
    %c7 = arith.constant 7 : index
    %c0_44 = arith.constant 0 : index
    %c0_45 = arith.constant 0 : index
    %54 = vector.load %arg6[%c7, %c0_44, %c0_45] : memref<9x8x8xbf16, #tpu.memory_space<vmem>>, vector<1x8x8xbf16>
    %55 = vector.shape_cast %54 : vector<1x8x8xbf16> to vector<8x8xbf16>
    %cst_46 = arith.constant dense<0.000000e+00> : vector<8x324xf32>
    %56 = tpu.matmul %55, %53, %cst_46 {dimension_numbers = #tpu.dot_dimension_numbers<[1], [0], [0], [1], [0, 0, 1, 1], [], []>} : vector<8x8xbf16>, vector<8x324xbf16>, vector<8x324xf32> -> vector<8x324xf32>
    %57 = arith.addf %52, %56 : vector<8x324xf32>
    %c0_47 = arith.constant 0 : index
    %c38 = arith.constant 38 : index
    %58 = vector.load %arg10[%c0_47, %c38] : memref<8x362xbf16, #tpu.memory_space<vmem>>, vector<8x324xbf16>
    %c8 = arith.constant 8 : index
    %c0_48 = arith.constant 0 : index
    %c0_49 = arith.constant 0 : index
    %59 = vector.load %arg6[%c8, %c0_48, %c0_49] : memref<9x8x8xbf16, #tpu.memory_space<vmem>>, vector<1x8x8xbf16>
    %60 = vector.shape_cast %59 : vector<1x8x8xbf16> to vector<8x8xbf16>
    %cst_50 = arith.constant dense<0.000000e+00> : vector<8x324xf32>
    %61 = tpu.matmul %60, %58, %cst_50 {dimension_numbers = #tpu.dot_dimension_numbers<[1], [0], [0], [1], [0, 0, 1, 1], [], []>} : vector<8x8xbf16>, vector<8x324xbf16>, vector<8x324xf32> -> vector<8x324xf32>
    %62 = arith.addf %57, %61 : vector<8x324xf32>
    %63 = vector.broadcast %3 : vector<1x324xf32> to vector<8x324xf32>
    %64 = arith.mulf %62, %63 : vector<8x324xf32>
    %65 = arith.truncf %64 : vector<8x324xf32> to vector<8x324xbf16>
    %c0_51 = arith.constant 0 : index
    %c0_52 = arith.constant 0 : index
    %c0_53 = arith.constant 0 : index
    %66 = vector.load %arg7[%c0_51, %c0_52, %c0_53] : memref<1x8x324xbf16, #tpu.memory_space<vmem>>, vector<1x8x324xbf16>
    %67 = vector.shape_cast %66 : vector<1x8x324xbf16> to vector<8x324xbf16>
    %68 = vector.shape_cast %65 : vector<8x324xbf16> to vector<1x8x324xbf16>
    tpu.vector_store %arg7[%c0_51, %c0_52, %c0_53], %68 {strides = array<i32>} : memref<1x8x324xbf16, #tpu.memory_space<vmem>>, vector<1x8x324xbf16>,
    %c0_54 = arith.constant 0 : index
    %c0_55 = arith.constant 0 : index
    %c0_56 = arith.constant 0 : index
    %69 = vector.load %arg8[%c0_54, %c0_55, %c0_56] : memref<1x8x1xf32, #tpu.memory_space<vmem>>, vector<1x8x1xf32>
    %70 = vector.shape_cast %69 : vector<1x8x1xf32> to vector<8x1xf32>
    %cst_57 = arith.constant dense<0.000000e+00> : vector<8xf32>
    %71 = vector.multi_reduction <add>, %64, %cst_57 [1] : vector<8x324xf32> to vector<8xf32>
    %72 = vector.shape_cast %71 : vector<8xf32> to vector<8x1xf32>
    %73 = arith.addf %70, %72 : vector<8x1xf32>
    %c0_58 = arith.constant 0 : index
    %c0_59 = arith.constant 0 : index
    %c0_60 = arith.constant 0 : index
    %74 = vector.load %arg8[%c0_58, %c0_59, %c0_60] : memref<1x8x1xf32, #tpu.memory_space<vmem>>, vector<1x8x1xf32>
    %75 = vector.shape_cast %74 : vector<1x8x1xf32> to vector<8x1xf32>
    %76 = vector.shape_cast %73 : vector<8x1xf32> to vector<1x8x1xf32>
    tpu.vector_store %arg8[%c0_58, %c0_59, %c0_60], %76 {strides = array<i32>} : memref<1x8x1xf32, #tpu.memory_space<vmem>>, vector<1x8x1xf32>,
    %c0_61 = arith.constant 0 : index
    %c0_62 = arith.constant 0 : index
    %c0_63 = arith.constant 0 : index
    %77 = vector.load %arg9[%c0_61, %c0_62, %c0_63] : memref<1x8x1xf32, #tpu.memory_space<vmem>>, vector<1x8x1xf32>
    %78 = vector.shape_cast %77 : vector<1x8x1xf32> to vector<8x1xf32>
    %79 = arith.mulf %64, %64 : vector<8x324xf32>
    %cst_64 = arith.constant dense<0.000000e+00> : vector<8xf32>
    %80 = vector.multi_reduction <add>, %79, %cst_64 [1] : vector<8x324xf32> to vector<8xf32>
    %81 = vector.shape_cast %80 : vector<8xf32> to vector<8x1xf32>
    %82 = arith.addf %78, %81 : vector<8x1xf32>
    %c0_65 = arith.constant 0 : index
    %c0_66 = arith.constant 0 : index
    %c0_67 = arith.constant 0 : index
    %83 = vector.load %arg9[%c0_65, %c0_66, %c0_67] : memref<1x8x1xf32, #tpu.memory_space<vmem>>, vector<1x8x1xf32>
    %84 = vector.shape_cast %83 : vector<1x8x1xf32> to vector<8x1xf32>
    %85 = vector.shape_cast %82 : vector<8x1xf32> to vector<1x8x1xf32>
    tpu.vector_store %arg9[%c0_65, %c0_66, %c0_67], %85 {strides = array<i32>} : memref<1x8x1xf32, #tpu.memory_space<vmem>>, vector<1x8x1xf32>,
    return
  }
  func.func @transform_0(%arg0: i32, %arg1: i32) -> (i32, i32, i32) {
    %c1_i32 = arith.constant 1 : i32
    %0 = arith.muli %arg0, %c1_i32 : i32
    %1 = arith.addi %0, %arg1 : i32
    %c0_i32 = arith.constant 0 : i32
    %c0_i32_0 = arith.constant 0 : i32
    %c0_i32_1 = arith.constant 0 : i32
    return %1, %c0_i32, %c0_i32_0 : i32, i32, i32
  }
  func.func @transform_1(%arg0: i32, %arg1: i32) -> (i32, i32) {
    %c0_i32 = arith.constant 0 : i32
    %c0_i32_0 = arith.constant 0 : i32
    %c0_i32_1 = arith.constant 0 : i32
    return %c0_i32, %c0_i32_0 : i32, i32
  }
  func.func @transform_2(%arg0: i32, %arg1: i32) -> (i32, i32) {
    %c0_i32 = arith.constant 0 : i32
    %c0_i32_0 = arith.constant 0 : i32
    %c0_i32_1 = arith.constant 0 : i32
    return %c0_i32, %c0_i32_0 : i32, i32
  }
  func.func @transform_3(%arg0: i32, %arg1: i32) -> (i32, i32) {
    %c0_i32 = arith.constant 0 : i32
    %c0_i32_0 = arith.constant 0 : i32
    %c0_i32_1 = arith.constant 0 : i32
    return %c0_i32, %c0_i32_0 : i32, i32
  }
  func.func @transform_4(%arg0: i32, %arg1: i32) -> (i32, i32, i32) {
    %c0_i32 = arith.constant 0 : i32
    %c0_i32_0 = arith.constant 0 : i32
    %c0_i32_1 = arith.constant 0 : i32
    %c0_i32_2 = arith.constant 0 : i32
    return %c0_i32, %c0_i32_0, %c0_i32_1 : i32, i32, i32
  }
  func.func @transform_5(%arg0: i32, %arg1: i32) -> (i32, i32, i32) {
    %c1_i32 = arith.constant 1 : i32
    %0 = arith.muli %arg0, %c1_i32 : i32
    %1 = arith.addi %0, %arg1 : i32
    %c0_i32 = arith.constant 0 : i32
    %c0_i32_0 = arith.constant 0 : i32
    %c0_i32_1 = arith.constant 0 : i32
    return %1, %c0_i32, %c0_i32_0 : i32, i32, i32
  }
  func.func @transform_6(%arg0: i32, %arg1: i32) -> (i32, i32, i32) {
    %c0_i32 = arith.constant 0 : i32
    %c0_i32_0 = arith.constant 0 : i32
    %c0_i32_1 = arith.constant 0 : i32
    return %arg0, %c0_i32, %c0_i32_0 : i32, i32, i32
  }
  func.func @transform_7(%arg0: i32, %arg1: i32) -> (i32, i32, i32) {
    %c0_i32 = arith.constant 0 : i32
    %c0_i32_0 = arith.constant 0 : i32
    %c0_i32_1 = arith.constant 0 : i32
    return %arg0, %c0_i32, %c0_i32_0 : i32, i32, i32
  }
}

module attributes {stable_mosaic.version = 11 : i64} {
  func.func @_conv3_stats_kernel(%arg0: i32, %arg1: i32, %arg2: memref<1x8x324xbf16, #tpu.memory_space<vmem>>, %arg3: memref<1x324xf32, #tpu.memory_space<vmem>>, %arg4: memref<8x1xf32, #tpu.memory_space<vmem>>, %arg5: memref<8x1xf32, #tpu.memory_space<vmem>>, %arg6: memref<4x8xbf16, #tpu.memory_space<vmem>>, %arg7: memref<1x4x324xbf16, #tpu.memory_space<vmem>>, %arg8: memref<1x4x1xf32, #tpu.memory_space<vmem>>, %arg9: memref<1x4x1xf32, #tpu.memory_space<vmem>>) attributes {dimension_semantics = [#tpu.dimension_semantics<parallel>, #tpu.dimension_semantics<arbitrary>], iteration_bounds = array<i64: 2, 1>, scalar_prefetch = 0 : i64, scratch_operands = 0 : i64, tpu.core_type = #tpu.core_type<tc>, window_params = [{transform_indices = @transform_0, window_bounds = array<i64: 1, 8, 324>}, {pipeline_mode = #tpu.pipeline_mode<synchronous>, transform_indices = @transform_1, window_bounds = array<i64: 1, 324>}, {pipeline_mode = #tpu.pipeline_mode<synchronous>, transform_indices = @transform_2, window_bounds = array<i64: 8, 1>}, {pipeline_mode = #tpu.pipeline_mode<synchronous>, transform_indices = @transform_3, window_bounds = array<i64: 8, 1>}, {pipeline_mode = #tpu.pipeline_mode<synchronous>, transform_indices = @transform_4, window_bounds = array<i64: 4, 8>}, {transform_indices = @transform_5, window_bounds = array<i64: 1, 4, 324>}, {transform_indices = @transform_6, window_bounds = array<i64: 1, 4, 1>}, {transform_indices = @transform_7, window_bounds = array<i64: 1, 4, 1>}]} {
    %c0_i32 = arith.constant 0 : i32
    %0 = arith.cmpi eq, %arg1, %c0_i32 : i32
    %1 = arith.extui %0 : i1 to i32
    %c0_i32_0 = arith.constant 0 : i32
    %2 = arith.cmpi ne, %1, %c0_i32_0 : i32
    scf.if %2 {
      %cst_29 = arith.constant 0.000000e+00 : f32
      %41 = vector.broadcast %cst_29 : f32 to vector<4x1xf32>
      %c0_30 = arith.constant 0 : index
      %c0_31 = arith.constant 0 : index
      %c0_32 = arith.constant 0 : index
      %42 = vector.load %arg8[%c0_30, %c0_31, %c0_32] : memref<1x4x1xf32, #tpu.memory_space<vmem>>, vector<1x4x1xf32>
      %43 = vector.shape_cast %42 : vector<1x4x1xf32> to vector<4x1xf32>
      %44 = vector.shape_cast %41 : vector<4x1xf32> to vector<1x4x1xf32>
      tpu.vector_store %arg8[%c0_30, %c0_31, %c0_32], %44 {strides = array<i32>} : memref<1x4x1xf32, #tpu.memory_space<vmem>>, vector<1x4x1xf32>,
      %cst_33 = arith.constant 0.000000e+00 : f32
      %45 = vector.broadcast %cst_33 : f32 to vector<4x1xf32>
      %c0_34 = arith.constant 0 : index
      %c0_35 = arith.constant 0 : index
      %c0_36 = arith.constant 0 : index
      %46 = vector.load %arg9[%c0_34, %c0_35, %c0_36] : memref<1x4x1xf32, #tpu.memory_space<vmem>>, vector<1x4x1xf32>
      %47 = vector.shape_cast %46 : vector<1x4x1xf32> to vector<4x1xf32>
      %48 = vector.shape_cast %45 : vector<4x1xf32> to vector<1x4x1xf32>
      tpu.vector_store %arg9[%c0_34, %c0_35, %c0_36], %48 {strides = array<i32>} : memref<1x4x1xf32, #tpu.memory_space<vmem>>, vector<1x4x1xf32>,
    } else {
    }
    %c0 = arith.constant 0 : index
    %c0_1 = arith.constant 0 : index
    %c0_2 = arith.constant 0 : index
    %3 = vector.load %arg2[%c0, %c0_1, %c0_2] : memref<1x8x324xbf16, #tpu.memory_space<vmem>>, vector<1x8x324xbf16>
    %4 = vector.shape_cast %3 : vector<1x8x324xbf16> to vector<8x324xbf16>
    %c0_3 = arith.constant 0 : index
    %c0_4 = arith.constant 0 : index
    %5 = vector.load %arg4[%c0_3, %c0_4] : memref<8x1xf32, #tpu.memory_space<vmem>>, vector<8x1xf32>
    %6 = arith.extf %4 : vector<8x324xbf16> to vector<8x324xf32>
    %7 = vector.broadcast %5 : vector<8x1xf32> to vector<8x324xf32>
    %8 = arith.mulf %6, %7 : vector<8x324xf32>
    %c0_5 = arith.constant 0 : index
    %c0_6 = arith.constant 0 : index
    %9 = vector.load %arg5[%c0_5, %c0_6] : memref<8x1xf32, #tpu.memory_space<vmem>>, vector<8x1xf32>
    %10 = vector.broadcast %9 : vector<8x1xf32> to vector<8x324xf32>
    %11 = arith.addf %8, %10 : vector<8x324xf32>
    %cst = arith.constant 0.000000e+00 : f32
    %12 = vector.broadcast %cst : f32 to vector<8x324xf32>
    %13 = arith.maximumf %11, %12 : vector<8x324xf32>
    %c0_7 = arith.constant 0 : index
    %c0_8 = arith.constant 0 : index
    %14 = vector.load %arg3[%c0_7, %c0_8] : memref<1x324xf32, #tpu.memory_space<vmem>>, vector<1x324xf32>
    %15 = vector.broadcast %14 : vector<1x324xf32> to vector<8x324xf32>
    %16 = arith.mulf %13, %15 : vector<8x324xf32>
    %c0_9 = arith.constant 0 : index
    %c0_10 = arith.constant 0 : index
    %17 = vector.load %arg6[%c0_9, %c0_10] : memref<4x8xbf16, #tpu.memory_space<vmem>>, vector<4x8xbf16>
    %18 = arith.truncf %16 : vector<8x324xf32> to vector<8x324xbf16>
    %cst_11 = arith.constant dense<0.000000e+00> : vector<4x324xf32>
    %19 = tpu.matmul %17, %18, %cst_11 {dimension_numbers = #tpu.dot_dimension_numbers<[1], [0], [0], [1], [0, 0, 1, 1], [], []>} : vector<4x8xbf16>, vector<8x324xbf16>, vector<4x324xf32> -> vector<4x324xf32>
    %20 = arith.truncf %19 : vector<4x324xf32> to vector<4x324xbf16>
    %c0_12 = arith.constant 0 : index
    %c0_13 = arith.constant 0 : index
    %c0_14 = arith.constant 0 : index
    %21 = vector.load %arg7[%c0_12, %c0_13, %c0_14] : memref<1x4x324xbf16, #tpu.memory_space<vmem>>, vector<1x4x324xbf16>
    %22 = vector.shape_cast %21 : vector<1x4x324xbf16> to vector<4x324xbf16>
    %23 = vector.shape_cast %20 : vector<4x324xbf16> to vector<1x4x324xbf16>
    tpu.vector_store %arg7[%c0_12, %c0_13, %c0_14], %23 {strides = array<i32>} : memref<1x4x324xbf16, #tpu.memory_space<vmem>>, vector<1x4x324xbf16>,
    %c0_15 = arith.constant 0 : index
    %c0_16 = arith.constant 0 : index
    %c0_17 = arith.constant 0 : index
    %24 = vector.load %arg8[%c0_15, %c0_16, %c0_17] : memref<1x4x1xf32, #tpu.memory_space<vmem>>, vector<1x4x1xf32>
    %25 = vector.shape_cast %24 : vector<1x4x1xf32> to vector<4x1xf32>
    %cst_18 = arith.constant dense<0.000000e+00> : vector<4xf32>
    %26 = vector.multi_reduction <add>, %19, %cst_18 [1] : vector<4x324xf32> to vector<4xf32>
    %27 = vector.shape_cast %26 : vector<4xf32> to vector<4x1xf32>
    %28 = arith.addf %25, %27 : vector<4x1xf32>
    %c0_19 = arith.constant 0 : index
    %c0_20 = arith.constant 0 : index
    %c0_21 = arith.constant 0 : index
    %29 = vector.load %arg8[%c0_19, %c0_20, %c0_21] : memref<1x4x1xf32, #tpu.memory_space<vmem>>, vector<1x4x1xf32>
    %30 = vector.shape_cast %29 : vector<1x4x1xf32> to vector<4x1xf32>
    %31 = vector.shape_cast %28 : vector<4x1xf32> to vector<1x4x1xf32>
    tpu.vector_store %arg8[%c0_19, %c0_20, %c0_21], %31 {strides = array<i32>} : memref<1x4x1xf32, #tpu.memory_space<vmem>>, vector<1x4x1xf32>,
    %c0_22 = arith.constant 0 : index
    %c0_23 = arith.constant 0 : index
    %c0_24 = arith.constant 0 : index
    %32 = vector.load %arg9[%c0_22, %c0_23, %c0_24] : memref<1x4x1xf32, #tpu.memory_space<vmem>>, vector<1x4x1xf32>
    %33 = vector.shape_cast %32 : vector<1x4x1xf32> to vector<4x1xf32>
    %34 = arith.mulf %19, %19 : vector<4x324xf32>
    %cst_25 = arith.constant dense<0.000000e+00> : vector<4xf32>
    %35 = vector.multi_reduction <add>, %34, %cst_25 [1] : vector<4x324xf32> to vector<4xf32>
    %36 = vector.shape_cast %35 : vector<4xf32> to vector<4x1xf32>
    %37 = arith.addf %33, %36 : vector<4x1xf32>
    %c0_26 = arith.constant 0 : index
    %c0_27 = arith.constant 0 : index
    %c0_28 = arith.constant 0 : index
    %38 = vector.load %arg9[%c0_26, %c0_27, %c0_28] : memref<1x4x1xf32, #tpu.memory_space<vmem>>, vector<1x4x1xf32>
    %39 = vector.shape_cast %38 : vector<1x4x1xf32> to vector<4x1xf32>
    %40 = vector.shape_cast %37 : vector<4x1xf32> to vector<1x4x1xf32>
    tpu.vector_store %arg9[%c0_26, %c0_27, %c0_28], %40 {strides = array<i32>} : memref<1x4x1xf32, #tpu.memory_space<vmem>>, vector<1x4x1xf32>,
    return
  }
  func.func @transform_0(%arg0: i32, %arg1: i32) -> (i32, i32, i32) {
    %c1_i32 = arith.constant 1 : i32
    %0 = arith.muli %arg0, %c1_i32 : i32
    %1 = arith.addi %0, %arg1 : i32
    %c0_i32 = arith.constant 0 : i32
    %c0_i32_0 = arith.constant 0 : i32
    %c0_i32_1 = arith.constant 0 : i32
    return %1, %c0_i32, %c0_i32_0 : i32, i32, i32
  }
  func.func @transform_1(%arg0: i32, %arg1: i32) -> (i32, i32) {
    %c0_i32 = arith.constant 0 : i32
    %c0_i32_0 = arith.constant 0 : i32
    %c0_i32_1 = arith.constant 0 : i32
    return %c0_i32, %c0_i32_0 : i32, i32
  }
  func.func @transform_2(%arg0: i32, %arg1: i32) -> (i32, i32) {
    %c0_i32 = arith.constant 0 : i32
    %c0_i32_0 = arith.constant 0 : i32
    %c0_i32_1 = arith.constant 0 : i32
    return %c0_i32, %c0_i32_0 : i32, i32
  }
  func.func @transform_3(%arg0: i32, %arg1: i32) -> (i32, i32) {
    %c0_i32 = arith.constant 0 : i32
    %c0_i32_0 = arith.constant 0 : i32
    %c0_i32_1 = arith.constant 0 : i32
    return %c0_i32, %c0_i32_0 : i32, i32
  }
  func.func @transform_4(%arg0: i32, %arg1: i32) -> (i32, i32) {
    %c0_i32 = arith.constant 0 : i32
    %c0_i32_0 = arith.constant 0 : i32
    %c0_i32_1 = arith.constant 0 : i32
    return %c0_i32, %c0_i32_0 : i32, i32
  }
  func.func @transform_5(%arg0: i32, %arg1: i32) -> (i32, i32, i32) {
    %c1_i32 = arith.constant 1 : i32
    %0 = arith.muli %arg0, %c1_i32 : i32
    %1 = arith.addi %0, %arg1 : i32
    %c0_i32 = arith.constant 0 : i32
    %c0_i32_0 = arith.constant 0 : i32
    %c0_i32_1 = arith.constant 0 : i32
    return %1, %c0_i32, %c0_i32_0 : i32, i32, i32
  }
  func.func @transform_6(%arg0: i32, %arg1: i32) -> (i32, i32, i32) {
    %c0_i32 = arith.constant 0 : i32
    %c0_i32_0 = arith.constant 0 : i32
    %c0_i32_1 = arith.constant 0 : i32
    return %arg0, %c0_i32, %c0_i32_0 : i32, i32, i32
  }
  func.func @transform_7(%arg0: i32, %arg1: i32) -> (i32, i32, i32) {
    %c0_i32 = arith.constant 0 : i32
    %c0_i32_0 = arith.constant 0 : i32
    %c0_i32_1 = arith.constant 0 : i32
    return %arg0, %c0_i32, %c0_i32_0 : i32, i32, i32
  }
}

module attributes {stable_mosaic.version = 11 : i64} {
  func.func @_bn_residual_relu_kernel(%arg0: i32, %arg1: memref<1x4x324xbf16, #tpu.memory_space<vmem>>, %arg2: memref<1x4x324xbf16, #tpu.memory_space<vmem>>, %arg3: memref<4x1xf32, #tpu.memory_space<vmem>>, %arg4: memref<4x1xf32, #tpu.memory_space<vmem>>, %arg5: memref<1x4x324xf32, #tpu.memory_space<vmem>>) attributes {dimension_semantics = [#tpu.dimension_semantics<parallel>], iteration_bounds = array<i64: 2>, scalar_prefetch = 0 : i64, scratch_operands = 0 : i64, tpu.core_type = #tpu.core_type<tc>, window_params = [{transform_indices = @transform_0, window_bounds = array<i64: 1, 4, 324>}, {transform_indices = @transform_1, window_bounds = array<i64: 1, 4, 324>}, {pipeline_mode = #tpu.pipeline_mode<synchronous>, transform_indices = @transform_2, window_bounds = array<i64: 4, 1>}, {pipeline_mode = #tpu.pipeline_mode<synchronous>, transform_indices = @transform_3, window_bounds = array<i64: 4, 1>}, {transform_indices = @transform_4, window_bounds = array<i64: 1, 4, 324>}]} {
    %c0 = arith.constant 0 : index
    %c0_0 = arith.constant 0 : index
    %c0_1 = arith.constant 0 : index
    %0 = vector.load %arg1[%c0, %c0_0, %c0_1] : memref<1x4x324xbf16, #tpu.memory_space<vmem>>, vector<1x4x324xbf16>
    %1 = vector.shape_cast %0 : vector<1x4x324xbf16> to vector<4x324xbf16>
    %c0_2 = arith.constant 0 : index
    %c0_3 = arith.constant 0 : index
    %2 = vector.load %arg3[%c0_2, %c0_3] : memref<4x1xf32, #tpu.memory_space<vmem>>, vector<4x1xf32>
    %3 = arith.extf %1 : vector<4x324xbf16> to vector<4x324xf32>
    %4 = vector.broadcast %2 : vector<4x1xf32> to vector<4x324xf32>
    %5 = arith.mulf %3, %4 : vector<4x324xf32>
    %c0_4 = arith.constant 0 : index
    %c0_5 = arith.constant 0 : index
    %6 = vector.load %arg4[%c0_4, %c0_5] : memref<4x1xf32, #tpu.memory_space<vmem>>, vector<4x1xf32>
    %7 = vector.broadcast %6 : vector<4x1xf32> to vector<4x324xf32>
    %8 = arith.addf %5, %7 : vector<4x324xf32>
    %c0_6 = arith.constant 0 : index
    %c0_7 = arith.constant 0 : index
    %c0_8 = arith.constant 0 : index
    %9 = vector.load %arg2[%c0_6, %c0_7, %c0_8] : memref<1x4x324xbf16, #tpu.memory_space<vmem>>, vector<1x4x324xbf16>
    %10 = vector.shape_cast %9 : vector<1x4x324xbf16> to vector<4x324xbf16>
    %11 = arith.extf %10 : vector<4x324xbf16> to vector<4x324xf32>
    %12 = arith.addf %8, %11 : vector<4x324xf32>
    %cst = arith.constant 0.000000e+00 : f32
    %13 = vector.broadcast %cst : f32 to vector<4x324xf32>
    %14 = arith.maximumf %12, %13 : vector<4x324xf32>
    %c0_9 = arith.constant 0 : index
    %c0_10 = arith.constant 0 : index
    %c0_11 = arith.constant 0 : index
    %15 = vector.load %arg5[%c0_9, %c0_10, %c0_11] : memref<1x4x324xf32, #tpu.memory_space<vmem>>, vector<1x4x324xf32>
    %16 = vector.shape_cast %15 : vector<1x4x324xf32> to vector<4x324xf32>
    %17 = vector.shape_cast %14 : vector<4x324xf32> to vector<1x4x324xf32>
    tpu.vector_store %arg5[%c0_9, %c0_10, %c0_11], %17 {strides = array<i32>} : memref<1x4x324xf32, #tpu.memory_space<vmem>>, vector<1x4x324xf32>,
    return
  }
  func.func @transform_0(%arg0: i32) -> (i32, i32, i32) {
    %c0_i32 = arith.constant 0 : i32
    %c0_i32_0 = arith.constant 0 : i32
    %c0_i32_1 = arith.constant 0 : i32
    return %arg0, %c0_i32, %c0_i32_0 : i32, i32, i32
  }
  func.func @transform_1(%arg0: i32) -> (i32, i32, i32) {
    %c0_i32 = arith.constant 0 : i32
    %c0_i32_0 = arith.constant 0 : i32
    %c0_i32_1 = arith.constant 0 : i32
    return %arg0, %c0_i32, %c0_i32_0 : i32, i32, i32
  }
  func.func @transform_2(%arg0: i32) -> (i32, i32) {
    %c0_i32 = arith.constant 0 : i32
    %c0_i32_0 = arith.constant 0 : i32
    %c0_i32_1 = arith.constant 0 : i32
    return %c0_i32, %c0_i32_0 : i32, i32
  }
  func.func @transform_3(%arg0: i32) -> (i32, i32) {
    %c0_i32 = arith.constant 0 : i32
    %c0_i32_0 = arith.constant 0 : i32
    %c0_i32_1 = arith.constant 0 : i32
    return %c0_i32, %c0_i32_0 : i32, i32
  }
  func.func @transform_4(%arg0: i32) -> (i32, i32, i32) {
    %c0_i32 = arith.constant 0 : i32
    %c0_i32_0 = arith.constant 0 : i32
    %c0_i32_1 = arith.constant 0 : i32
    return %arg0, %c0_i32, %c0_i32_0 : i32, i32, i32
  }
}

</mosaic_0001>

<llo_original>
// kernel: resnet50_basic_block.6
$region0: #{resnet50_basic_block.6}
  #allocation0 [shape = 'u32[]', space=smem, size = 0x4, offset = 0x4, fixed_abs, tag = 'smem constant byte address 0x4 - core index']
  #allocation1 [shape = 'u32[72,128]{1,0:T(1,128)}', space=vmem, size = 0x9000, scoped, tag = 'internal scratch']
  %s0 = inlined_call_operand.vmem [shape: bf16[2,8,324], index: 0, kind: input, shape index: {}]
  %s1 = inlined_call_operand.vmem [shape: f32[1,324], index: 1, kind: input, shape index: {}]
  %s2 = inlined_call_operand.vmem [shape: f32[8,1], index: 2, kind: input, shape index: {}]
  %s3 = inlined_call_operand.vmem [shape: f32[8,1], index: 3, kind: input, shape index: {}]
  %s4 = inlined_call_operand.vmem [shape: bf16[4,8], index: 4, kind: input, shape index: {}]
  %s5 = inlined_call_operand.vmem [shape: bf16[2,4,324], index: 5, kind: output, shape index: {0}]
  %s6 = inlined_call_operand.vmem [shape: f32[2,4,1], index: 6, kind: output, shape index: {1}]
  %s7 = inlined_call_operand.vmem [shape: f32[2,4,1], index: 7, kind: output, shape index: {2}]
  %8 = xla_tuple %s5, %s6, %s7
  %s9 = sld [smem:[#allocation0]]
  $region73: #{resnet50_basic_block.6} parent=0
    _
  %s11 = ssub.s32 1, %s9
  %s12 = scalar_select 0, %s11, %s9
  loop: start=0, step=1, limit=4
  $region2: #{resnet50_basic_block.6} parent=0 // loop_pre_header
    _
  $region3: #{resnet50_basic_block.6} parent=0 // loop_header
    %s14 = sphi 0, %s18
    %p15 = scmp.ge.s32.totalorder %s14, 4
    %s21 = sphi 0, %s33
    %s22 = sphi 0, %s29
    %s23 = sphi 0, %s21
    %s24 = sphi 0, %s22
    %s25 = sphi 0, %s23
    %s26 = sphi 0, %s24
    %s38 = sphi 0, %s40
    %s41 = sphi 0, %s38
    %s42 = sphi 0, %s41
    %s58 = sphi 0, %s42
    %s62 = sphi 0, %s62
    %s64 = sphi 0, %s62
    %s65 = sphi 0, %s64
    %s79 = sphi 0, %s65
    %s83 = sphi 0, %s83
    %s85 = sphi 0, %s83
    %s86 = sphi 0, %s85
    %s100 = sphi 0, %s86
    %s104 = sphi 0, %s104
    %s106 = sphi 0, %s104
    %s107 = sphi 0, %s106
    %s121 = sphi 0, %s107
    %s125 = sphi 0, %s125
    %s127 = sphi 0, %s125
    %s128 = sphi 0, %s127
    %s142 = sphi 0, %s128
    %s150 = sphi 0, %s152
    %s153 = sphi 0, %s150
    %s154 = sphi 0, %s153
    %s170 = sphi 0, %s154
    %s176 = sphi 0, %s178
    %s179 = sphi 0, %s176
    %s180 = sphi 0, %s179
    %s196 = sphi 0, %s180
    %s202 = sphi 0, %s204
    %s205 = sphi 0, %s202
    %s206 = sphi 0, %s205
    %s222 = sphi 0, %s206
  $region4: #{resnet50_basic_block.6} parent=0 // loop_header_branch
    %17 = sbr.rel (%p15) target = $region8
  $region5: #{resnet50_basic_block.6} parent=0 // loop_body
    %s19 = ssub.s32 %s14, 1
    %s20 = ssub.s32 %s14, 2
    %s27 = sadd.s32 1, %s22
    %p28 = scmp.ge.s32.totalorder %s27, 1
    %s29 = scalar_select %p28, 0, %s27
    %s30 = sadd.s32 1, %s21
    %s31 = scalar_select %p28, %s30, %s21
    %p32 = scmp.ge.s32.totalorder %s31, 2
    %s33 = scalar_select %p32, 0, %s31
    %s34 = sadd.s32 %s21, %s22
    %s35 = sadd.s32 %s33, %s29
    %s36 = ssub.s32 %s34, %s35
    %p37 = scmp.eq.s32.totalorder %s36, 0
    %s39 = sadd.s32 %s38, 1
    %s40 = scalar_select %p37, %s38, %s39
    %p43 = pneg %p37
    %p44 = scmp.eq.s32.totalorder %s14, 1
    %p45 = por %p43, %p44
    %p46 = scmp.ne.s32.totalorder %s38, %s41
    %p47 = scmp.eq.s32.totalorder %s14, 0
    %p48 = por %p46, %p47
    %p49 = scmp.ne.s32.totalorder %s38, %s41
    %p50 = scmp.eq.s32.totalorder %s19, 1
    %p51 = por %p49, %p50
    %p52 = scmp.ne.s32.totalorder %s41, %s42
    %p53 = scmp.eq.s32.totalorder %s19, 0
    %p54 = por %p52, %p53
    %p55 = scmp.ne.s32.totalorder %s41, %s42
    %p56 = scmp.eq.s32.totalorder %s20, 1
    %p57 = por %p55, %p56
    %p59 = scmp.ne.s32.totalorder %s42, %s58
    %p60 = scmp.eq.s32.totalorder %s20, 0
    %p61 = por %p59, %p60
    %s63 = sadd.s32 %s62, 1
    %p66 = scmp.eq.s32.totalorder %s14, 1
    %p67 = scmp.ne.s32.totalorder %s62, %s64
    %p68 = scmp.eq.s32.totalorder %s14, 0
    %p69 = por %p67, %p68
    %p70 = scmp.ne.s32.totalorder %s62, %s64
    %p71 = scmp.eq.s32.totalorder %s19, 1
    %p72 = por %p70, %p71
    %p73 = scmp.ne.s32.totalorder %s64, %s65
    %p74 = scmp.eq.s32.totalorder %s19, 0
    %p75 = por %p73, %p74
    %p76 = scmp.ne.s32.totalorder %s64, %s65
    %p77 = scmp.eq.s32.totalorder %s20, 1
    %p78 = por %p76, %p77
    %p80 = scmp.ne.s32.totalorder %s65, %s79
    %p81 = scmp.eq.s32.totalorder %s20, 0
    %p82 = por %p80, %p81
    %s84 = sadd.s32 %s83, 1
    %p87 = scmp.eq.s32.totalorder %s14, 1
    %p88 = scmp.ne.s32.totalorder %s83, %s85
    %p89 = scmp.eq.s32.totalorder %s14, 0
    %p90 = por %p88, %p89
    %p91 = scmp.ne.s32.totalorder %s83, %s85
    %p92 = scmp.eq.s32.totalorder %s19, 1
    %p93 = por %p91, %p92
    %p94 = scmp.ne.s32.totalorder %s85, %s86
    %p95 = scmp.eq.s32.totalorder %s19, 0
    %p96 = por %p94, %p95
    %p97 = scmp.ne.s32.totalorder %s85, %s86
    %p98 = scmp.eq.s32.totalorder %s20, 1
    %p99 = por %p97, %p98
    %p101 = scmp.ne.s32.totalorder %s86, %s100
    %p102 = scmp.eq.s32.totalorder %s20, 0
    %p103 = por %p101, %p102
    %s105 = sadd.s32 %s104, 1
    %p108 = scmp.eq.s32.totalorder %s14, 1
    %p109 = scmp.ne.s32.totalorder %s104, %s106
    %p110 = scmp.eq.s32.totalorder %s14, 0
    %p111 = por %p109, %p110
    %p112 = scmp.ne.s32.totalorder %s104, %s106
    %p113 = scmp.eq.s32.totalorder %s19, 1
    %p114 = por %p112, %p113
    %p115 = scmp.ne.s32.totalorder %s106, %s107
    %p116 = scmp.eq.s32.totalorder %s19, 0
    %p117 = por %p115, %p116
    %p118 = scmp.ne.s32.totalorder %s106, %s107
    %p119 = scmp.eq.s32.totalorder %s20, 1
    %p120 = por %p118, %p119
    %p122 = scmp.ne.s32.totalorder %s107, %s121
    %p123 = scmp.eq.s32.totalorder %s20, 0
    %p124 = por %p122, %p123
    %s126 = sadd.s32 %s125, 1
    %p129 = scmp.eq.s32.totalorder %s14, 1
    %p130 = scmp.ne.s32.totalorder %s125, %s127
    %p131 = scmp.eq.s32.totalorder %s14, 0
    %p132 = por %p130, %p131
    %p133 = scmp.ne.s32.totalorder %s125, %s127
    %p134 = scmp.eq.s32.totalorder %s19, 1
    %p135 = por %p133, %p134
    %p136 = scmp.ne.s32.totalorder %s127, %s128
    %p137 = scmp.eq.s32.totalorder %s19, 0
    %p138 = por %p136, %p137
    %p139 = scmp.ne.s32.totalorder %s127, %s128
    %p140 = scmp.eq.s32.totalorder %s20, 1
    %p141 = por %p139, %p140
    %p143 = scmp.ne.s32.totalorder %s128, %s142
    %p144 = scmp.eq.s32.totalorder %s20, 0
    %p145 = por %p143, %p144
    %s146 = sadd.s32 %s21, %s22
    %s147 = sadd.s32 %s33, %s29
    %s148 = ssub.s32 %s146, %s147
    %p149 = scmp.eq.s32.totalorder %s148, 0
    %s151 = sadd.s32 %s150, 1
    %s152 = scalar_select %p149, %s150, %s151
    %p155 = pneg %p149
    %p156 = scmp.eq.s32.totalorder %s14, 1
    %p157 = por %p155, %p156
    %p158 = scmp.ne.s32.totalorder %s150, %s153
    %p159 = scmp.eq.s32.totalorder %s14, 0
    %p160 = por %p158, %p159
    %p161 = scmp.ne.s32.totalorder %s150, %s153
    %p162 = scmp.eq.s32.totalorder %s19, 1
    %p163 = por %p161, %p162
    %p164 = scmp.ne.s32.totalorder %s153, %s154
    %p165 = scmp.eq.s32.totalorder %s19, 0
    %p166 = por %p164, %p165
    %p167 = scmp.ne.s32.totalorder %s153, %s154
    %p168 = scmp.eq.s32.totalorder %s20, 1
    %p169 = por %p167, %p168
    %p171 = scmp.ne.s32.totalorder %s154, %s170
    %p172 = scmp.eq.s32.totalorder %s20, 0
    %p173 = por %p171, %p172
    %s174 = ssub.s32 %s21, %s33
    %p175 = scmp.eq.s32.totalorder %s174, 0
    %s177 = sadd.s32 %s176, 1
    %s178 = scalar_select %p175, %s176, %s177
    %p181 = pneg %p175
    %p182 = scmp.eq.s32.totalorder %s14, 1
    %p183 = por %p181, %p182
    %p184 = scmp.ne.s32.totalorder %s176, %s179
    %p185 = scmp.eq.s32.totalorder %s14, 0
    %p186 = por %p184, %p185
    %p187 = scmp.ne.s32.totalorder %s176, %s179
    %p188 = scmp.eq.s32.totalorder %s19, 1
    %p189 = por %p187, %p188
    %p190 = scmp.ne.s32.totalorder %s179, %s180
    %p191 = scmp.eq.s32.totalorder %s19, 0
    %p192 = por %p190, %p191
    %p193 = scmp.ne.s32.totalorder %s179, %s180
    %p194 = scmp.eq.s32.totalorder %s20, 1
    %p195 = por %p193, %p194
    %p197 = scmp.ne.s32.totalorder %s180, %s196
    %p198 = scmp.eq.s32.totalorder %s20, 0
    %p199 = por %p197, %p198
    %s200 = ssub.s32 %s21, %s33
    %p201 = scmp.eq.s32.totalorder %s200, 0
    %s203 = sadd.s32 %s202, 1
    %s204 = scalar_select %p201, %s202, %s203
    %p207 = pneg %p201
    %p208 = scmp.eq.s32.totalorder %s14, 1
    %p209 = por %p207, %p208
    %p210 = scmp.ne.s32.totalorder %s202, %s205
    %p211 = scmp.eq.s32.totalorder %s14, 0
    %p212 = por %p210, %p211
    %p213 = scmp.ne.s32.totalorder %s202, %s205
    %p214 = scmp.eq.s32.totalorder %s19, 1
    %p215 = por %p213, %p214
    %p216 = scmp.ne.s32.totalorder %s205, %s206
    %p217 = scmp.eq.s32.totalorder %s19, 0
    %p218 = por %p216, %p217
    %p219 = scmp.ne.s32.totalorder %s205, %s206
    %p220 = scmp.eq.s32.totalorder %s20, 1
    %p221 = por %p219, %p220
    %p223 = scmp.ne.s32.totalorder %s206, %s222
    %p224 = scmp.eq.s32.totalorder %s20, 0
    %p225 = por %p223, %p224
    %p226 = scmp.le.s32.totalorder 1, %s14
    %p227 = scmp.lt.s32.totalorder %s14, 3
    %p228 = pnand %p226, %p227
    %p229 = pneg %p228
    // Predicated region
    $region9: #{resnet50_basic_block.6} parent=5 // pred_check
      _
    $region10: #{resnet50_basic_block.6} parent=5 // pred_check_branch
      %231 = sbr.rel (%p228) target = $region12
    $region11: #{resnet50_basic_block.6} parent=5 // pred_region
      %s232 = ssub.s32 %s14, 1
      // Predicated region
      $region13: #{resnet50_basic_block.6} parent=11 // pred_check
        %p233 = pneg %p75
      $region14: #{resnet50_basic_block.6} parent=11 // pred_check_branch
        %235 = sbr.rel (%p233) target = $region16
      $region15: #{resnet50_basic_block.6} parent=11 // pred_region
        _
      $region16: #{resnet50_basic_block.6} parent=11 // pred_fallthru
        _
      // Predicated region
      $region17: #{resnet50_basic_block.6} parent=11 // pred_check
        %p236 = pneg %p96
      $region18: #{resnet50_basic_block.6} parent=11 // pred_check_branch
        %238 = sbr.rel (%p236) target = $region20
      $region19: #{resnet50_basic_block.6} parent=11 // pred_region
        _
      $region20: #{resnet50_basic_block.6} parent=11 // pred_fallthru
        _
      // Predicated region
      $region21: #{resnet50_basic_block.6} parent=11 // pred_check
        %p239 = pneg %p117
      $region22: #{resnet50_basic_block.6} parent=11 // pred_check_branch
        %241 = sbr.rel (%p239) target = $region24
      $region23: #{resnet50_basic_block.6} parent=11 // pred_region
        _
      $region24: #{resnet50_basic_block.6} parent=11 // pred_fallthru
        _
      // Predicated region
      $region25: #{resnet50_basic_block.6} parent=11 // pred_check
        %p242 = pneg %p138
      $region26: #{resnet50_basic_block.6} parent=11 // pred_check_branch
        %244 = sbr.rel (%p242) target = $region28
      $region27: #{resnet50_basic_block.6} parent=11 // pred_region
        _
      $region28: #{resnet50_basic_block.6} parent=11 // pred_fallthru
        _
    $region12: #{resnet50_basic_block.6} parent=5 // pred_fallthru
      _
    %p245 = scmp.lt.s32.totalorder %s14, 2
    // Predicated region
    $region29: #{resnet50_basic_block.6} parent=5 // pred_check
      %p246 = pneg %p245
    $region30: #{resnet50_basic_block.6} parent=5 // pred_check_branch
      %248 = sbr.rel (%p246) target = $region32
    $region31: #{resnet50_basic_block.6} parent=5 // pred_region
      // Predicated region
      $region33: #{resnet50_basic_block.6} parent=31 // pred_check
        %p249 = pneg %p48
      $region34: #{resnet50_basic_block.6} parent=31 // pred_check_branch
        %251 = sbr.rel (%p249) target = $region36
      $region35: #{resnet50_basic_block.6} parent=31 // pred_region
        %s252 = sadd.s32 %s21, %s22
        %p253 = scmp.lt.s32.totalorder %s252, 1
        %s254 = scalar_select %p253, %s252, 1
        %s255 = smul.addr %s254, 3
        %s256 = smul.addr %s255, 4
        %s257 = scalar_lea.vmem %s0, %s256
        %s258 = sadd.s32 %s21, %s22
      $region36: #{resnet50_basic_block.6} parent=31 // pred_fallthru
        _
    $region32: #{resnet50_basic_block.6} parent=5 // pred_fallthru
      _
    %p259 = scmp.le.s32.totalorder 1, %s14
    %p260 = scmp.lt.s32.totalorder %s14, 3
    %p261 = pnand %p259, %p260
    %p262 = pneg %p261
    // Predicated region
    $region37: #{resnet50_basic_block.6} parent=5 // pred_check
      _
    $region38: #{resnet50_basic_block.6} parent=5 // pred_check_branch
      %264 = sbr.rel (%p261) target = $region40
    $region39: #{resnet50_basic_block.6} parent=5 // pred_region
      %s265 = ssub.s32 %s14, 1
      %s266 = sadd.s32 %s23, %s24
      %p267 = scmp.lt.s32.totalorder %s266, 1
      %s268 = scalar_select %p267, %s266, 1
      %s269 = smul.addr %s268, 3
      %s270 = smul.addr %s269, 4
      %s271 = scalar_lea.vmem %s0, %s270
      %p272 = pneg %p54
      %p273 = pneg %p51
      %p274 = pneg %p75
      %p275 = pneg %p72
      %p276 = pneg %p96
      %p277 = pneg %p93
      %p278 = pneg %p117
      %p279 = pneg %p114
      %p280 = pneg %p138
      %p281 = pneg %p135
      %p282 = pneg %p166
      %p283 = pneg %p163
      %s284 = sadd.s32 %s23, %s24
      %p285 = scmp.lt.s32.totalorder %s284, 1
      %s286 = scalar_select %p285, %s284, 1
      %s287 = smul.addr %s286, 3
      %s288 = smul.addr %s287, 2
      %s289 = scalar_lea.vmem %s5, %s288
      %p290 = pneg %p192
      %p291 = pneg %p189
      %p292 = scmp.lt.s32.totalorder %s23, 1
      %s293 = scalar_select %p292, %s23, 1
      %s294 = smul.addr %s293, 4
      %s295 = scalar_lea.vmem %s6, %s294
      %p296 = pneg %p218
      %p297 = pneg %p215
      %p298 = scmp.lt.s32.totalorder %s23, 1
      %s299 = scalar_select %p298, %s23, 1
      %s300 = smul.addr %s299, 4
      %s301 = scalar_lea.vmem %s7, %s300
      %s302 = sadd.s32 %s23, %s24
      %p303 = scmp.lt.s32.totalorder %s302, 1
      %s304 = scalar_select %p303, %s302, 1
      %s305 = smul.addr %s304, 3
      %s306 = smul.addr %s305, 4
      %s307 = scalar_lea.vmem %s0, %s306
      %s308 = sadd.s32 %s23, %s24
      %s309 = sadd.s32 %s23, %s24
      %p310 = scmp.lt.s32.totalorder %s309, 1
      %s311 = scalar_select %p310, %s309, 1
      %s312 = smul.addr %s311, 3
      %s313 = smul.addr %s312, 2
      %s314 = scalar_lea.vmem %s5, %s313
      %s315 = sadd.s32 %s23, %s24
      %p316 = scmp.lt.s32.totalorder %s23, 1
      %s317 = scalar_select %p316, %s23, 1
      %s318 = smul.addr %s317, 4
      %s319 = scalar_lea.vmem %s6, %s318
      %p320 = scmp.lt.s32.totalorder %s23, 1
      %s321 = scalar_select %p320, %s23, 1
      %s322 = smul.addr %s321, 4
      %s323 = scalar_lea.vmem %s7, %s322
      %p325 = scmp.eq.s32.totalorder %s24, 0
      // Predicated region
      $region41: #{resnet50_basic_block.6} parent=39 // pred_check
        %p326 = pneg %p325
      $region42: #{resnet50_basic_block.6} parent=39 // pred_check_branch
        %328 = sbr.rel (%p326) target = $region44
      $region43: #{resnet50_basic_block.6} parent=39 // pred_region
        %vm329 = vcmask 3072
        %330 = vst.msk [vmem:[%s319] sm:$0xf] %vm329, 0.0
        %331 = vst.msk [vmem:[%s323] sm:$0xf] %vm329, 0.0
      $region44: #{resnet50_basic_block.6} parent=39 // pred_fallthru
        _
      %v332 = vld [vmem:[%s307] sm:$0xff]
      %v333 = vld [vmem:[%s307 + $0x8] sm:$0xf]
      %v334 = vld [vmem:[%s2] sm:$0xff]
      %v335 = vunpack.c.l.bf16 %v332
      %v336 = vunpack.c.h.bf16 %v332
      %v337 = vunpack.c.l.bf16 %v333
      %339 = vset.pattern.permute.xlu0 0
      %340 = vperm.xlu0 %339, %v334
      %v341 = vpop.permute.xlu0 %340
      %v343 = vmul.f32 %v335, %v341
      %v344 = vmul.f32 %v336, %v341
      %v345 = vmul.f32 %v337, %v341
      %v346 = vld [vmem:[%s3] sm:$0xff]
      %348 = vset.pattern.permute.xlu0 0
      %349 = vperm.xlu0 %348, %v346
      %v350 = vpop.permute.xlu0 %349
      %v352 = vadd.f32 %v343, %v350
      %v353 = vadd.f32 %v344, %v350
      %v354 = vadd.f32 %v345, %v350
      %v355 = vmax.f32 %v352, 0.0
      %v356 = vmax.f32 %v353, 0.0
      %v357 = vmax.f32 %v354, 0.0
      %v358 = vld [vmem:[%s1] sm:$0x7]
      %v360 = vperm.slane %v358, 0
      %v361 = vperm.slane %v358, 1
      %v362 = vperm.slane %v358, 2
      %v366 = vmul.f32 %v355, %v360
      %v367 = vmul.f32 %v356, %v361
      %v368 = vmul.f32 %v357, %v362
      %v369 = vld [vmem:[%s4] sm:$0x3]
      %v370 = vpack.c.bf16 %v366, %v366
      %v371 = vpack.c.bf16 %v367, %v367
      %v372 = vpack.c.bf16 %v368, %v368
      %vm373 = vcmask 64512
      %v375 = vsel %vm373, %v369, 0
      %vm377 = vcmask 1043456
      %v379 = vsel %vm377, %v370, 0
      %v382 = vsel %vm377, %v371, 0
      %v385 = vsel %vm377, %v372, 0
      %387 = vmatpush.bf16.msra.mxu0 0
      %388 = vmatpush.bf16.msra.mxu0 0
      %389 = vmatpush.bf16.msra.mxu0 0
      %390 = vmatpush.bf16.msra.mxu0 0
      %391 = vmatpush.bf16.msra.mxu0 0
      %392 = vmatpush.bf16.msra.mxu0 0
      %393 = vmatpush.bf16.msra.mxu0 0
      %394 = vmatpush.bf16.msra.mxu0 %v379
      %395 = vmatmul.bf16.gmra.mxu0 %v375
      %v396 = vpop.f32.mrf.mxu0
      %v397 = vadd.f32 0.0, %v396
      %v398 = vpop.f32.mrf.mxu0
      %399 = vdwg.mxu0
      %400 = vmatpush.bf16.msra.mxu0 0
      %401 = vmatpush.bf16.msra.mxu0 0
      %402 = vmatpush.bf16.msra.mxu0 0
      %403 = vmatpush.bf16.msra.mxu0 0
      %404 = vmatpush.bf16.msra.mxu0 0
      %405 = vmatpush.bf16.msra.mxu0 0
      %406 = vmatpush.bf16.msra.mxu0 0
      %407 = vmatpush.bf16.msra.mxu0 %v382
      %408 = vmatmul.bf16.gmra.mxu0 %v375
      %v409 = vpop.f32.mrf.mxu0
      %v410 = vadd.f32 0.0, %v409
      %v411 = vpop.f32.mrf.mxu0
      %412 = vdwg.mxu0
      %413 = vmatpush.bf16.msra.mxu0 0
      %414 = vmatpush.bf16.msra.mxu0 0
      %415 = vmatpush.bf16.msra.mxu0 0
      %416 = vmatpush.bf16.msra.mxu0 0
      %417 = vmatpush.bf16.msra.mxu0 0
      %418 = vmatpush.bf16.msra.mxu0 0
      %419 = vmatpush.bf16.msra.mxu0 0
      %420 = vmatpush.bf16.msra.mxu0 %v385
      %421 = vmatmul.bf16.gmra.mxu0 %v375
      %v422 = vpop.f32.mrf.mxu0
      %v423 = vadd.f32 0.0, %v422
      %v424 = vpop.f32.mrf.mxu0
      %425 = vdwg.mxu0
      %v426 = vpack.c.bf16 %v410, %v397
      %v427 = vpack.c.bf16 %v423, %v423
      %v430 = vrot.slane %v426, 2
      %v431 = vrot.slane %v427, 4
      %v432 = vrot.slane %v427, 6
      %vm433 = vcmask 1041408
      %v436 = vsel %vm433, %v426, %v430
      %vm437 = vcmask 1045508
      %v440 = vsel %vm437, %v431, %v432
      %v441 = vsel %vm377, %v436, %v440
      %vm443 = vcmask 1043458
      %vm444 = vmor %vm443, %vm433
      %vm445 = vcmask 553988
      %vm446 = vmor %vm445, %vm444
      %447 = vst.msk [vmem:[%s314] sm:$0x3f] %vm446, %v441
      %v448 = vld [vmem:[%s319] sm:$0xf]
      %v449 = vsel %vm377, %v397, 0.0
      %v450 = vsel %vm377, %v410, 0.0
      %v451 = vadd.f32 %v449, %v450
      %vm452 = vcmask 551936
      %v453 = vsel %vm452, %v423, 0.0
      %v454 = vadd.f32 %v451, %v453
      %455 = vadd.xlane.f32.xlu0 %v454
      %v456 = vpop.xlane.xlu0 %455
      %v457 = vadd.f32 %v448, %v456
      %vm458 = vcmask 3072
      %459 = vst.msk [vmem:[%s319] sm:$0xf] %vm458, %v457
      %v460 = vld [vmem:[%s323] sm:$0xf]
      %v461 = vmul.f32 %v397, %v397
      %v462 = vmul.f32 %v410, %v410
      %v463 = vmul.f32 %v423, %v423
      %v464 = vsel %vm377, %v461, 0.0
      %v465 = vsel %vm377, %v462, 0.0
      %v466 = vadd.f32 %v464, %v465
      %v467 = vsel %vm452, %v463, 0.0
      %v468 = vadd.f32 %v466, %v467
      %469 = vadd.xlane.f32.xlu0 %v468
      %v470 = vpop.xlane.xlu0 %469
      %v471 = vadd.f32 %v460, %v470
      %472 = vst.msk [vmem:[%s323] sm:$0xf] %vm458, %v471
      %s473 = sadd.s32 %s23, %s24
      %p474 = scmp.lt.s32.totalorder %s473, 1
      %s475 = scalar_select %p474, %s473, 1
      %s476 = smul.addr %s475, 3
      %s477 = smul.addr %s476, 2
      %s478 = scalar_lea.vmem %s5, %s477
      %p479 = scmp.lt.s32.totalorder %s23, 1
      %s480 = scalar_select %p479, %s23, 1
      %s481 = smul.addr %s480, 4
      %s482 = scalar_lea.vmem %s6, %s481
      %p483 = scmp.lt.s32.totalorder %s23, 1
      %s484 = scalar_select %p483, %s23, 1
      %s485 = smul.addr %s484, 4
      %s486 = scalar_lea.vmem %s7, %s485
      // Predicated region
      $region45: #{resnet50_basic_block.6} parent=39 // pred_check
        %p487 = pneg %p163
      $region46: #{resnet50_basic_block.6} parent=39 // pred_check_branch
        %489 = sbr.rel (%p487) target = $region48
      $region47: #{resnet50_basic_block.6} parent=39 // pred_region
        %s490 = sadd.s32 %s23, %s24
      $region48: #{resnet50_basic_block.6} parent=39 // pred_fallthru
        _
      // Predicated region
      $region49: #{resnet50_basic_block.6} parent=39 // pred_check
        %p491 = pneg %p189
      $region50: #{resnet50_basic_block.6} parent=39 // pred_check_branch
        %493 = sbr.rel (%p491) target = $region52
      $region51: #{resnet50_basic_block.6} parent=39 // pred_region
        _
      $region52: #{resnet50_basic_block.6} parent=39 // pred_fallthru
        _
      // Predicated region
      $region53: #{resnet50_basic_block.6} parent=39 // pred_check
        %p494 = pneg %p215
      $region54: #{resnet50_basic_block.6} parent=39 // pred_check_branch
        %496 = sbr.rel (%p494) target = $region56
      $region55: #{resnet50_basic_block.6} parent=39 // pred_region
        _
      $region56: #{resnet50_basic_block.6} parent=39 // pred_fallthru
        _
    $region40: #{resnet50_basic_block.6} parent=5 // pred_fallthru
      _
    %p497 = scmp.le.s32.totalorder 2, %s14
    // Predicated region
    $region57: #{resnet50_basic_block.6} parent=5 // pred_check
      %p498 = pneg %p497
    $region58: #{resnet50_basic_block.6} parent=5 // pred_check_branch
      %500 = sbr.rel (%p498) target = $region60
    $region59: #{resnet50_basic_block.6} parent=5 // pred_region
      %s501 = ssub.s32 %s14, 2
      // Predicated region
      $region61: #{resnet50_basic_block.6} parent=59 // pred_check
        %p502 = pneg %p169
      $region62: #{resnet50_basic_block.6} parent=59 // pred_check_branch
        %504 = sbr.rel (%p502) target = $region64
      $region63: #{resnet50_basic_block.6} parent=59 // pred_region
        %s505 = sadd.s32 %s25, %s26
        %p506 = scmp.lt.s32.totalorder %s505, 1
        %s507 = scalar_select %p506, %s505, 1
        %s508 = smul.addr %s507, 3
        %s509 = smul.addr %s508, 2
        %s510 = scalar_lea.vmem %s5, %s509
      $region64: #{resnet50_basic_block.6} parent=59 // pred_fallthru
        _
      // Predicated region
      $region65: #{resnet50_basic_block.6} parent=59 // pred_check
        %p511 = pneg %p195
      $region66: #{resnet50_basic_block.6} parent=59 // pred_check_branch
        %513 = sbr.rel (%p511) target = $region68
      $region67: #{resnet50_basic_block.6} parent=59 // pred_region
        %p514 = scmp.lt.s32.totalorder %s25, 1
        %s515 = scalar_select %p514, %s25, 1
        %s516 = smul.addr %s515, 4
        %s517 = scalar_lea.vmem %s6, %s516
      $region68: #{resnet50_basic_block.6} parent=59 // pred_fallthru
        _
      // Predicated region
      $region69: #{resnet50_basic_block.6} parent=59 // pred_check
        %p518 = pneg %p221
      $region70: #{resnet50_basic_block.6} parent=59 // pred_check_branch
        %520 = sbr.rel (%p518) target = $region72
      $region71: #{resnet50_basic_block.6} parent=59 // pred_region
        %p521 = scmp.lt.s32.totalorder %s25, 1
        %s522 = scalar_select %p521, %s25, 1
        %s523 = smul.addr %s522, 4
        %s524 = scalar_lea.vmem %s7, %s523
      $region72: #{resnet50_basic_block.6} parent=59 // pred_fallthru
        _
    $region60: #{resnet50_basic_block.6} parent=5 // pred_fallthru
      _
  $region6: #{resnet50_basic_block.6} parent=0 // loop_footer
    %s18 = sadd.s32 1, %s14
  $region7: #{resnet50_basic_block.6} parent=0 // loop_footer_branch
    %13 = sbr.rel target = $region3
  $region8: #{resnet50_basic_block.6} parent=0 // loop_exit
    _

// kernel: resnet50_basic_block.4
$region0: #{resnet50_basic_block.4}
  #allocation0 [shape = 'u32[]', space=smem, size = 0x4, offset = 0x4, fixed_abs, tag = 'smem constant byte address 0x4 - core index']
  #allocation1 [shape = 'u32[72,128]{1,0:T(1,128)}', space=vmem, size = 0x9000, scoped, tag = 'internal scratch']
  %s0 = inlined_call_operand.vmem [shape: bf16[2,4,324], index: 0, kind: input, shape index: {}]
  %s1 = inlined_call_operand.vmem [shape: bf16[8,4], index: 1, kind: input, shape index: {}]
  %s2 = inlined_call_operand.vmem [shape: bf16[2,8,324], index: 2, kind: output, shape index: {0}]
  %s3 = inlined_call_operand.vmem [shape: f32[2,8,1], index: 3, kind: output, shape index: {1}]
  %s4 = inlined_call_operand.vmem [shape: f32[2,8,1], index: 4, kind: output, shape index: {2}]
  %5 = xla_tuple %s2, %s3, %s4
  %s6 = sld [smem:[#allocation0]]
  $region61: #{resnet50_basic_block.4} parent=0
    _
  %s8 = ssub.s32 1, %s6
  %s9 = scalar_select 0, %s8, %s6
  loop: start=0, step=1, limit=4
  $region2: #{resnet50_basic_block.4} parent=0 // loop_pre_header
    _
  $region3: #{resnet50_basic_block.4} parent=0 // loop_header
    %s11 = sphi 0, %s15
    %p12 = scmp.ge.s32.totalorder %s11, 4
    %s18 = sphi 0, %s30
    %s19 = sphi 0, %s26
    %s20 = sphi 0, %s18
    %s21 = sphi 0, %s19
    %s22 = sphi 0, %s20
    %s23 = sphi 0, %s21
    %s35 = sphi 0, %s37
    %s38 = sphi 0, %s35
    %s39 = sphi 0, %s38
    %s55 = sphi 0, %s39
    %s59 = sphi 0, %s59
    %s61 = sphi 0, %s59
    %s62 = sphi 0, %s61
    %s76 = sphi 0, %s62
    %s84 = sphi 0, %s86
    %s87 = sphi 0, %s84
    %s88 = sphi 0, %s87
    %s104 = sphi 0, %s88
    %s110 = sphi 0, %s112
    %s113 = sphi 0, %s110
    %s114 = sphi 0, %s113
    %s130 = sphi 0, %s114
    %s136 = sphi 0, %s138
    %s139 = sphi 0, %s136
    %s140 = sphi 0, %s139
    %s156 = sphi 0, %s140
  $region4: #{resnet50_basic_block.4} parent=0 // loop_header_branch
    %14 = sbr.rel (%p12) target = $region8
  $region5: #{resnet50_basic_block.4} parent=0 // loop_body
    %s16 = ssub.s32 %s11, 1
    %s17 = ssub.s32 %s11, 2
    %s24 = sadd.s32 1, %s19
    %p25 = scmp.ge.s32.totalorder %s24, 1
    %s26 = scalar_select %p25, 0, %s24
    %s27 = sadd.s32 1, %s18
    %s28 = scalar_select %p25, %s27, %s18
    %p29 = scmp.ge.s32.totalorder %s28, 2
    %s30 = scalar_select %p29, 0, %s28
    %s31 = sadd.s32 %s18, %s19
    %s32 = sadd.s32 %s30, %s26
    %s33 = ssub.s32 %s31, %s32
    %p34 = scmp.eq.s32.totalorder %s33, 0
    %s36 = sadd.s32 %s35, 1
    %s37 = scalar_select %p34, %s35, %s36
    %p40 = pneg %p34
    %p41 = scmp.eq.s32.totalorder %s11, 1
    %p42 = por %p40, %p41
    %p43 = scmp.ne.s32.totalorder %s35, %s38
    %p44 = scmp.eq.s32.totalorder %s11, 0
    %p45 = por %p43, %p44
    %p46 = scmp.ne.s32.totalorder %s35, %s38
    %p47 = scmp.eq.s32.totalorder %s16, 1
    %p48 = por %p46, %p47
    %p49 = scmp.ne.s32.totalorder %s38, %s39
    %p50 = scmp.eq.s32.totalorder %s16, 0
    %p51 = por %p49, %p50
    %p52 = scmp.ne.s32.totalorder %s38, %s39
    %p53 = scmp.eq.s32.totalorder %s17, 1
    %p54 = por %p52, %p53
    %p56 = scmp.ne.s32.totalorder %s39, %s55
    %p57 = scmp.eq.s32.totalorder %s17, 0
    %p58 = por %p56, %p57
    %s60 = sadd.s32 %s59, 1
    %p63 = scmp.eq.s32.totalorder %s11, 1
    %p64 = scmp.ne.s32.totalorder %s59, %s61
    %p65 = scmp.eq.s32.totalorder %s11, 0
    %p66 = por %p64, %p65
    %p67 = scmp.ne.s32.totalorder %s59, %s61
    %p68 = scmp.eq.s32.totalorder %s16, 1
    %p69 = por %p67, %p68
    %p70 = scmp.ne.s32.totalorder %s61, %s62
    %p71 = scmp.eq.s32.totalorder %s16, 0
    %p72 = por %p70, %p71
    %p73 = scmp.ne.s32.totalorder %s61, %s62
    %p74 = scmp.eq.s32.totalorder %s17, 1
    %p75 = por %p73, %p74
    %p77 = scmp.ne.s32.totalorder %s62, %s76
    %p78 = scmp.eq.s32.totalorder %s17, 0
    %p79 = por %p77, %p78
    %s80 = sadd.s32 %s18, %s19
    %s81 = sadd.s32 %s30, %s26
    %s82 = ssub.s32 %s80, %s81
    %p83 = scmp.eq.s32.totalorder %s82, 0
    %s85 = sadd.s32 %s84, 1
    %s86 = scalar_select %p83, %s84, %s85
    %p89 = pneg %p83
    %p90 = scmp.eq.s32.totalorder %s11, 1
    %p91 = por %p89, %p90
    %p92 = scmp.ne.s32.totalorder %s84, %s87
    %p93 = scmp.eq.s32.totalorder %s11, 0
    %p94 = por %p92, %p93
    %p95 = scmp.ne.s32.totalorder %s84, %s87
    %p96 = scmp.eq.s32.totalorder %s16, 1
    %p97 = por %p95, %p96
    %p98 = scmp.ne.s32.totalorder %s87, %s88
    %p99 = scmp.eq.s32.totalorder %s16, 0
    %p100 = por %p98, %p99
    %p101 = scmp.ne.s32.totalorder %s87, %s88
    %p102 = scmp.eq.s32.totalorder %s17, 1
    %p103 = por %p101, %p102
    %p105 = scmp.ne.s32.totalorder %s88, %s104
    %p106 = scmp.eq.s32.totalorder %s17, 0
    %p107 = por %p105, %p106
    %s108 = ssub.s32 %s18, %s30
    %p109 = scmp.eq.s32.totalorder %s108, 0
    %s111 = sadd.s32 %s110, 1
    %s112 = scalar_select %p109, %s110, %s111
    %p115 = pneg %p109
    %p116 = scmp.eq.s32.totalorder %s11, 1
    %p117 = por %p115, %p116
    %p118 = scmp.ne.s32.totalorder %s110, %s113
    %p119 = scmp.eq.s32.totalorder %s11, 0
    %p120 = por %p118, %p119
    %p121 = scmp.ne.s32.totalorder %s110, %s113
    %p122 = scmp.eq.s32.totalorder %s16, 1
    %p123 = por %p121, %p122
    %p124 = scmp.ne.s32.totalorder %s113, %s114
    %p125 = scmp.eq.s32.totalorder %s16, 0
    %p126 = por %p124, %p125
    %p127 = scmp.ne.s32.totalorder %s113, %s114
    %p128 = scmp.eq.s32.totalorder %s17, 1
    %p129 = por %p127, %p128
    %p131 = scmp.ne.s32.totalorder %s114, %s130
    %p132 = scmp.eq.s32.totalorder %s17, 0
    %p133 = por %p131, %p132
    %s134 = ssub.s32 %s18, %s30
    %p135 = scmp.eq.s32.totalorder %s134, 0
    %s137 = sadd.s32 %s136, 1
    %s138 = scalar_select %p135, %s136, %s137
    %p141 = pneg %p135
    %p142 = scmp.eq.s32.totalorder %s11, 1
    %p143 = por %p141, %p142
    %p144 = scmp.ne.s32.totalorder %s136, %s139
    %p145 = scmp.eq.s32.totalorder %s11, 0
    %p146 = por %p144, %p145
    %p147 = scmp.ne.s32.totalorder %s136, %s139
    %p148 = scmp.eq.s32.totalorder %s16, 1
    %p149 = por %p147, %p148
    %p150 = scmp.ne.s32.totalorder %s139, %s140
    %p151 = scmp.eq.s32.totalorder %s16, 0
    %p152 = por %p150, %p151
    %p153 = scmp.ne.s32.totalorder %s139, %s140
    %p154 = scmp.eq.s32.totalorder %s17, 1
    %p155 = por %p153, %p154
    %p157 = scmp.ne.s32.totalorder %s140, %s156
    %p158 = scmp.eq.s32.totalorder %s17, 0
    %p159 = por %p157, %p158
    %p160 = scmp.le.s32.totalorder 1, %s11
    %p161 = scmp.lt.s32.totalorder %s11, 3
    %p162 = pnand %p160, %p161
    %p163 = pneg %p162
    // Predicated region
    $region9: #{resnet50_basic_block.4} parent=5 // pred_check
      _
    $region10: #{resnet50_basic_block.4} parent=5 // pred_check_branch
      %165 = sbr.rel (%p162) target = $region12
    $region11: #{resnet50_basic_block.4} parent=5 // pred_region
      %s166 = ssub.s32 %s11, 1
      // Predicated region
      $region13: #{resnet50_basic_block.4} parent=11 // pred_check
        %p167 = pneg %p72
      $region14: #{resnet50_basic_block.4} parent=11 // pred_check_branch
        %169 = sbr.rel (%p167) target = $region16
      $region15: #{resnet50_basic_block.4} parent=11 // pred_region
        _
      $region16: #{resnet50_basic_block.4} parent=11 // pred_fallthru
        _
    $region12: #{resnet50_basic_block.4} parent=5 // pred_fallthru
      _
    %p170 = scmp.lt.s32.totalorder %s11, 2
    // Predicated region
    $region17: #{resnet50_basic_block.4} parent=5 // pred_check
      %p171 = pneg %p170
    $region18: #{resnet50_basic_block.4} parent=5 // pred_check_branch
      %173 = sbr.rel (%p171) target = $region20
    $region19: #{resnet50_basic_block.4} parent=5 // pred_region
      // Predicated region
      $region21: #{resnet50_basic_block.4} parent=19 // pred_check
        %p174 = pneg %p45
      $region22: #{resnet50_basic_block.4} parent=19 // pred_check_branch
        %176 = sbr.rel (%p174) target = $region24
      $region23: #{resnet50_basic_block.4} parent=19 // pred_region
        %s177 = sadd.s32 %s18, %s19
        %p178 = scmp.lt.s32.totalorder %s177, 1
        %s179 = scalar_select %p178, %s177, 1
        %s180 = smul.addr %s179, 3
        %s181 = smul.addr %s180, 2
        %s182 = scalar_lea.vmem %s0, %s181
        %s183 = sadd.s32 %s18, %s19
      $region24: #{resnet50_basic_block.4} parent=19 // pred_fallthru
        _
    $region20: #{resnet50_basic_block.4} parent=5 // pred_fallthru
      _
    %p184 = scmp.le.s32.totalorder 1, %s11
    %p185 = scmp.lt.s32.totalorder %s11, 3
    %p186 = pnand %p184, %p185
    %p187 = pneg %p186
    // Predicated region
    $region25: #{resnet50_basic_block.4} parent=5 // pred_check
      _
    $region26: #{resnet50_basic_block.4} parent=5 // pred_check_branch
      %189 = sbr.rel (%p186) target = $region28
    $region27: #{resnet50_basic_block.4} parent=5 // pred_region
      %s190 = ssub.s32 %s11, 1
      %s191 = sadd.s32 %s20, %s21
      %p192 = scmp.lt.s32.totalorder %s191, 1
      %s193 = scalar_select %p192, %s191, 1
      %s194 = smul.addr %s193, 3
      %s195 = smul.addr %s194, 2
      %s196 = scalar_lea.vmem %s0, %s195
      %p197 = pneg %p51
      %p198 = pneg %p48
      %p199 = pneg %p72
      %p200 = pneg %p69
      %p201 = pneg %p100
      %p202 = pneg %p97
      %s203 = sadd.s32 %s20, %s21
      %p204 = scmp.lt.s32.totalorder %s203, 1
      %s205 = scalar_select %p204, %s203, 1
      %s206 = smul.addr %s205, 3
      %s207 = smul.addr %s206, 4
      %s208 = scalar_lea.vmem %s2, %s207
      %p209 = pneg %p126
      %p210 = pneg %p123
      %p211 = scmp.lt.s32.totalorder %s20, 1
      %s212 = scalar_select %p211, %s20, 1
      %s213 = smul.addr %s212, 8
      %s214 = scalar_lea.vmem %s3, %s213
      %p215 = pneg %p152
      %p216 = pneg %p149
      %p217 = scmp.lt.s32.totalorder %s20, 1
      %s218 = scalar_select %p217, %s20, 1
      %s219 = smul.addr %s218, 8
      %s220 = scalar_lea.vmem %s4, %s219
      %s221 = sadd.s32 %s20, %s21
      %p222 = scmp.lt.s32.totalorder %s221, 1
      %s223 = scalar_select %p222, %s221, 1
      %s224 = smul.addr %s223, 3
      %s225 = smul.addr %s224, 2
      %s226 = scalar_lea.vmem %s0, %s225
      %s227 = sadd.s32 %s20, %s21
      %s228 = sadd.s32 %s20, %s21
      %p229 = scmp.lt.s32.totalorder %s228, 1
      %s230 = scalar_select %p229, %s228, 1
      %s231 = smul.addr %s230, 3
      %s232 = smul.addr %s231, 4
      %s233 = scalar_lea.vmem %s2, %s232
      %s234 = sadd.s32 %s20, %s21
      %p235 = scmp.lt.s32.totalorder %s20, 1
      %s236 = scalar_select %p235, %s20, 1
      %s237 = smul.addr %s236, 8
      %s238 = scalar_lea.vmem %s3, %s237
      %p239 = scmp.lt.s32.totalorder %s20, 1
      %s240 = scalar_select %p239, %s20, 1
      %s241 = smul.addr %s240, 8
      %s242 = scalar_lea.vmem %s4, %s241
      %p244 = scmp.eq.s32.totalorder %s21, 0
      // Predicated region
      $region29: #{resnet50_basic_block.4} parent=27 // pred_check
        %p245 = pneg %p244
      $region30: #{resnet50_basic_block.4} parent=27 // pred_check_branch
        %247 = sbr.rel (%p245) target = $region32
      $region31: #{resnet50_basic_block.4} parent=27 // pred_region
        %vm248 = vcmask 7168
        %249 = vst.msk [vmem:[%s238] sm:$0xff] %vm248, 0.0
        %250 = vst.msk [vmem:[%s242] sm:$0xff] %vm248, 0.0
      $region32: #{resnet50_basic_block.4} parent=27 // pred_fallthru
        _
      %v251 = vld [vmem:[%s1] sm:$0xf]
      %v252 = vld [vmem:[%s226] sm:$0x3f]
      %254 = vst [vmem:[#allocation1] ss:$4 sm:$0xff] %v252
      %v255 = vld.sshfl [vmem:[#allocation1] sm:$0xff pattern:$0x73625140]
      %v256 = vld.sshfl [vmem:[#allocation1 + $0x8] sm:$0xff pattern:$0x73625140]
      %v257 = vld.sshfl [vmem:[#allocation1 + $0x10] sm:$0xff pattern:$0x73625140]
      %vm258 = vcmask 31744
      %v260 = vsel %vm258, %v251, 0
      %vm262 = vcmask 1041408
      %v263 = vsel %vm262, %v255, 0
      %v265 = vsel %vm262, %v256, 0
      %v267 = vsel %vm262, %v257, 0
      %269 = vmatpush.bf16.msra.mxu0 0
      %270 = vmatpush.bf16.msra.mxu0 0
      %271 = vmatpush.bf16.msra.mxu0 0
      %272 = vmatpush.bf16.msra.mxu0 0
      %273 = vmatpush.bf16.msra.mxu0 0
      %274 = vmatpush.bf16.msra.mxu0 0
      %275 = vmatpush.bf16.msra.mxu0 0
      %276 = vmatpush.bf16.msra.mxu0 %v263
      %277 = vmatmul.bf16.gmra.mxu0 %v260
      %v278 = vpop.f32.mrf.mxu0
      %v279 = vadd.f32 0.0, %v278
      %v280 = vpop.f32.mrf.mxu0
      %281 = vdwg.mxu0
      %282 = vmatpush.bf16.msra.mxu0 0
      %283 = vmatpush.bf16.msra.mxu0 0
      %284 = vmatpush.bf16.msra.mxu0 0
      %285 = vmatpush.bf16.msra.mxu0 0
      %286 = vmatpush.bf16.msra.mxu0 0
      %287 = vmatpush.bf16.msra.mxu0 0
      %288 = vmatpush.bf16.msra.mxu0 0
      %289 = vmatpush.bf16.msra.mxu0 %v265
      %290 = vmatmul.bf16.gmra.mxu0 %v260
      %v291 = vpop.f32.mrf.mxu0
      %v292 = vadd.f32 0.0, %v291
      %v293 = vpop.f32.mrf.mxu0
      %294 = vdwg.mxu0
      %295 = vmatpush.bf16.msra.mxu0 0
      %296 = vmatpush.bf16.msra.mxu0 0
      %297 = vmatpush.bf16.msra.mxu0 0
      %298 = vmatpush.bf16.msra.mxu0 0
      %299 = vmatpush.bf16.msra.mxu0 0
      %300 = vmatpush.bf16.msra.mxu0 0
      %301 = vmatpush.bf16.msra.mxu0 0
      %302 = vmatpush.bf16.msra.mxu0 %v267
      %303 = vmatmul.bf16.gmra.mxu0 %v260
      %v304 = vpop.f32.mrf.mxu0
      %v305 = vadd.f32 0.0, %v304
      %v306 = vpop.f32.mrf.mxu0
      %307 = vdwg.mxu0
      %v308 = vpack.c.bf16 %v292, %v279
      %v309 = vpack.c.bf16 %v305, %v305
      %310 = vst [vmem:[%s233] sm:$0xff] %v308
      %vm311 = vcmask 551936
      %312 = vst.msk [vmem:[%s233 + $0x8] sm:$0xf] %vm311, %v309
      %v313 = vld [vmem:[%s238] sm:$0xff]
      %v314 = vadd.f32 %v279, %v292
      %vm315 = vcmask 556032
      %v316 = vsel %vm315, %v305, 0.0
      %v317 = vadd.f32 %v314, %v316
      %318 = vadd.xlane.f32.xlu0 %v317
      %v319 = vpop.xlane.xlu0 %318
      %v320 = vadd.f32 %v313, %v319
      %vm321 = vcmask 7168
      %322 = vst.msk [vmem:[%s238] sm:$0xff] %vm321, %v320
      %v323 = vld [vmem:[%s242] sm:$0xff]
      %v324 = vmul.f32 %v279, %v279
      %v325 = vmul.f32 %v292, %v292
      %v326 = vmul.f32 %v305, %v305
      %v327 = vadd.f32 %v324, %v325
      %v328 = vsel %vm315, %v326, 0.0
      %v329 = vadd.f32 %v327, %v328
      %330 = vadd.xlane.f32.xlu0 %v329
      %v331 = vpop.xlane.xlu0 %330
      %v332 = vadd.f32 %v323, %v331
      %333 = vst.msk [vmem:[%s242] sm:$0xff] %vm321, %v332
      %s334 = sadd.s32 %s20, %s21
      %p335 = scmp.lt.s32.totalorder %s334, 1
      %s336 = scalar_select %p335, %s334, 1
      %s337 = smul.addr %s336, 3
      %s338 = smul.addr %s337, 4
      %s339 = scalar_lea.vmem %s2, %s338
      %p340 = scmp.lt.s32.totalorder %s20, 1
      %s341 = scalar_select %p340, %s20, 1
      %s342 = smul.addr %s341, 8
      %s343 = scalar_lea.vmem %s3, %s342
      %p344 = scmp.lt.s32.totalorder %s20, 1
      %s345 = scalar_select %p344, %s20, 1
      %s346 = smul.addr %s345, 8
      %s347 = scalar_lea.vmem %s4, %s346
      // Predicated region
      $region33: #{resnet50_basic_block.4} parent=27 // pred_check
        %p348 = pneg %p97
      $region34: #{resnet50_basic_block.4} parent=27 // pred_check_branch
        %350 = sbr.rel (%p348) target = $region36
      $region35: #{resnet50_basic_block.4} parent=27 // pred_region
        %s351 = sadd.s32 %s20, %s21
      $region36: #{resnet50_basic_block.4} parent=27 // pred_fallthru
        _
      // Predicated region
      $region37: #{resnet50_basic_block.4} parent=27 // pred_check
        %p352 = pneg %p123
      $region38: #{resnet50_basic_block.4} parent=27 // pred_check_branch
        %354 = sbr.rel (%p352) target = $region40
      $region39: #{resnet50_basic_block.4} parent=27 // pred_region
        _
      $region40: #{resnet50_basic_block.4} parent=27 // pred_fallthru
        _
      // Predicated region
      $region41: #{resnet50_basic_block.4} parent=27 // pred_check
        %p355 = pneg %p149
      $region42: #{resnet50_basic_block.4} parent=27 // pred_check_branch
        %357 = sbr.rel (%p355) target = $region44
      $region43: #{resnet50_basic_block.4} parent=27 // pred_region
        _
      $region44: #{resnet50_basic_block.4} parent=27 // pred_fallthru
        _
    $region28: #{resnet50_basic_block.4} parent=5 // pred_fallthru
      _
    %p358 = scmp.le.s32.totalorder 2, %s11
    // Predicated region
    $region45: #{resnet50_basic_block.4} parent=5 // pred_check
      %p359 = pneg %p358
    $region46: #{resnet50_basic_block.4} parent=5 // pred_check_branch
      %361 = sbr.rel (%p359) target = $region48
    $region47: #{resnet50_basic_block.4} parent=5 // pred_region
      %s362 = ssub.s32 %s11, 2
      // Predicated region
      $region49: #{resnet50_basic_block.4} parent=47 // pred_check
        %p363 = pneg %p103
      $region50: #{resnet50_basic_block.4} parent=47 // pred_check_branch
        %365 = sbr.rel (%p363) target = $region52
      $region51: #{resnet50_basic_block.4} parent=47 // pred_region
        %s366 = sadd.s32 %s22, %s23
        %p367 = scmp.lt.s32.totalorder %s366, 1
        %s368 = scalar_select %p367, %s366, 1
        %s369 = smul.addr %s368, 3
        %s370 = smul.addr %s369, 4
        %s371 = scalar_lea.vmem %s2, %s370
      $region52: #{resnet50_basic_block.4} parent=47 // pred_fallthru
        _
      // Predicated region
      $region53: #{resnet50_basic_block.4} parent=47 // pred_check
        %p372 = pneg %p129
      $region54: #{resnet50_basic_block.4} parent=47 // pred_check_branch
        %374 = sbr.rel (%p372) target = $region56
      $region55: #{resnet50_basic_block.4} parent=47 // pred_region
        %p375 = scmp.lt.s32.totalorder %s22, 1
        %s376 = scalar_select %p375, %s22, 1
        %s377 = smul.addr %s376, 8
        %s378 = scalar_lea.vmem %s3, %s377
      $region56: #{resnet50_basic_block.4} parent=47 // pred_fallthru
        _
      // Predicated region
      $region57: #{resnet50_basic_block.4} parent=47 // pred_check
        %p379 = pneg %p155
      $region58: #{resnet50_basic_block.4} parent=47 // pred_check_branch
        %381 = sbr.rel (%p379) target = $region60
      $region59: #{resnet50_basic_block.4} parent=47 // pred_region
        %p382 = scmp.lt.s32.totalorder %s22, 1
        %s383 = scalar_select %p382, %s22, 1
        %s384 = smul.addr %s383, 8
        %s385 = scalar_lea.vmem %s4, %s384
      $region60: #{resnet50_basic_block.4} parent=47 // pred_fallthru
        _
    $region48: #{resnet50_basic_block.4} parent=5 // pred_fallthru
      _
  $region6: #{resnet50_basic_block.4} parent=0 // loop_footer
    %s15 = sadd.s32 1, %s11
  $region7: #{resnet50_basic_block.4} parent=0 // loop_footer_branch
    %10 = sbr.rel target = $region3
  $region8: #{resnet50_basic_block.4} parent=0 // loop_exit
    _

// kernel: resnet50_basic_block.7
$region0: #{resnet50_basic_block.7}
  #allocation0 [shape = 'u32[]', space=smem, size = 0x4, offset = 0x4, fixed_abs, tag = 'smem constant byte address 0x4 - core index']
  #allocation1 [shape = 'u32[72,128]{1,0:T(1,128)}', space=vmem, size = 0x9000, scoped, tag = 'internal scratch']
  %s0 = inlined_call_operand.vmem [shape: bf16[2,4,324], index: 0, kind: input, shape index: {}]
  %s1 = inlined_call_operand.vmem [shape: bf16[2,4,324], index: 1, kind: input, shape index: {}]
  %s2 = inlined_call_operand.vmem [shape: f32[4,1], index: 2, kind: input, shape index: {}]
  %s3 = inlined_call_operand.vmem [shape: f32[4,1], index: 3, kind: input, shape index: {}]
  %s4 = inlined_call_operand.vmem [shape: f32[2,4,324], index: 4, kind: output, shape index: {}]
  %s5 = sld [smem:[#allocation0]]
  $region49: #{resnet50_basic_block.7} parent=0
    _
  %s7 = ssub.s32 1, %s5
  %s8 = scalar_select 0, %s7, %s5
  loop: start=0, step=1, limit=4
  $region2: #{resnet50_basic_block.7} parent=0 // loop_pre_header
    _
  $region3: #{resnet50_basic_block.7} parent=0 // loop_header
    %s10 = sphi 0, %s14
    %p11 = scmp.ge.s32.totalorder %s10, 4
    %s20 = sphi 0, %s22
    %s23 = sphi 0, %s20
    %s24 = sphi 0, %s23
    %s40 = sphi 0, %s24
    %s46 = sphi 0, %s48
    %s49 = sphi 0, %s46
    %s50 = sphi 0, %s49
    %s66 = sphi 0, %s50
    %s70 = sphi 0, %s70
    %s72 = sphi 0, %s70
    %s73 = sphi 0, %s72
    %s87 = sphi 0, %s73
    %s91 = sphi 0, %s91
    %s93 = sphi 0, %s91
    %s94 = sphi 0, %s93
    %s108 = sphi 0, %s94
    %s114 = sphi 0, %s116
    %s117 = sphi 0, %s114
    %s118 = sphi 0, %s117
    %s134 = sphi 0, %s118
  $region4: #{resnet50_basic_block.7} parent=0 // loop_header_branch
    %13 = sbr.rel (%p11) target = $region8
  $region5: #{resnet50_basic_block.7} parent=0 // loop_body
    %s15 = ssub.s32 %s10, 1
    %s16 = ssub.s32 %s10, 2
    %s17 = sadd.s32 %s10, 1
    %s18 = ssub.s32 %s10, %s17
    %p19 = scmp.eq.s32.totalorder %s18, 0
    %s21 = sadd.s32 %s20, 1
    %s22 = scalar_select %p19, %s20, %s21
    %p25 = pneg %p19
    %p26 = scmp.eq.s32.totalorder %s10, 1
    %p27 = por %p25, %p26
    %p28 = scmp.ne.s32.totalorder %s20, %s23
    %p29 = scmp.eq.s32.totalorder %s10, 0
    %p30 = por %p28, %p29
    %p31 = scmp.ne.s32.totalorder %s20, %s23
    %p32 = scmp.eq.s32.totalorder %s15, 1
    %p33 = por %p31, %p32
    %p34 = scmp.ne.s32.totalorder %s23, %s24
    %p35 = scmp.eq.s32.totalorder %s15, 0
    %p36 = por %p34, %p35
    %p37 = scmp.ne.s32.totalorder %s23, %s24
    %p38 = scmp.eq.s32.totalorder %s16, 1
    %p39 = por %p37, %p38
    %p41 = scmp.ne.s32.totalorder %s24, %s40
    %p42 = scmp.eq.s32.totalorder %s16, 0
    %p43 = por %p41, %p42
    %s44 = ssub.s32 %s10, %s17
    %p45 = scmp.eq.s32.totalorder %s44, 0
    %s47 = sadd.s32 %s46, 1
    %s48 = scalar_select %p45, %s46, %s47
    %p51 = pneg %p45
    %p52 = scmp.eq.s32.totalorder %s10, 1
    %p53 = por %p51, %p52
    %p54 = scmp.ne.s32.totalorder %s46, %s49
    %p55 = scmp.eq.s32.totalorder %s10, 0
    %p56 = por %p54, %p55
    %p57 = scmp.ne.s32.totalorder %s46, %s49
    %p58 = scmp.eq.s32.totalorder %s15, 1
    %p59 = por %p57, %p58
    %p60 = scmp.ne.s32.totalorder %s49, %s50
    %p61 = scmp.eq.s32.totalorder %s15, 0
    %p62 = por %p60, %p61
    %p63 = scmp.ne.s32.totalorder %s49, %s50
    %p64 = scmp.eq.s32.totalorder %s16, 1
    %p65 = por %p63, %p64
    %p67 = scmp.ne.s32.totalorder %s50, %s66
    %p68 = scmp.eq.s32.totalorder %s16, 0
    %p69 = por %p67, %p68
    %s71 = sadd.s32 %s70, 1
    %p74 = scmp.eq.s32.totalorder %s10, 1
    %p75 = scmp.ne.s32.totalorder %s70, %s72
    %p76 = scmp.eq.s32.totalorder %s10, 0
    %p77 = por %p75, %p76
    %p78 = scmp.ne.s32.totalorder %s70, %s72
    %p79 = scmp.eq.s32.totalorder %s15, 1
    %p80 = por %p78, %p79
    %p81 = scmp.ne.s32.totalorder %s72, %s73
    %p82 = scmp.eq.s32.totalorder %s15, 0
    %p83 = por %p81, %p82
    %p84 = scmp.ne.s32.totalorder %s72, %s73
    %p85 = scmp.eq.s32.totalorder %s16, 1
    %p86 = por %p84, %p85
    %p88 = scmp.ne.s32.totalorder %s73, %s87
    %p89 = scmp.eq.s32.totalorder %s16, 0
    %p90 = por %p88, %p89
    %s92 = sadd.s32 %s91, 1
    %p95 = scmp.eq.s32.totalorder %s10, 1
    %p96 = scmp.ne.s32.totalorder %s91, %s93
    %p97 = scmp.eq.s32.totalorder %s10, 0
    %p98 = por %p96, %p97
    %p99 = scmp.ne.s32.totalorder %s91, %s93
    %p100 = scmp.eq.s32.totalorder %s15, 1
    %p101 = por %p99, %p100
    %p102 = scmp.ne.s32.totalorder %s93, %s94
    %p103 = scmp.eq.s32.totalorder %s15, 0
    %p104 = por %p102, %p103
    %p105 = scmp.ne.s32.totalorder %s93, %s94
    %p106 = scmp.eq.s32.totalorder %s16, 1
    %p107 = por %p105, %p106
    %p109 = scmp.ne.s32.totalorder %s94, %s108
    %p110 = scmp.eq.s32.totalorder %s16, 0
    %p111 = por %p109, %p110
    %s112 = ssub.s32 %s10, %s17
    %p113 = scmp.eq.s32.totalorder %s112, 0
    %s115 = sadd.s32 %s114, 1
    %s116 = scalar_select %p113, %s114, %s115
    %p119 = pneg %p113
    %p120 = scmp.eq.s32.totalorder %s10, 1
    %p121 = por %p119, %p120
    %p122 = scmp.ne.s32.totalorder %s114, %s117
    %p123 = scmp.eq.s32.totalorder %s10, 0
    %p124 = por %p122, %p123
    %p125 = scmp.ne.s32.totalorder %s114, %s117
    %p126 = scmp.eq.s32.totalorder %s15, 1
    %p127 = por %p125, %p126
    %p128 = scmp.ne.s32.totalorder %s117, %s118
    %p129 = scmp.eq.s32.totalorder %s15, 0
    %p130 = por %p128, %p129
    %p131 = scmp.ne.s32.totalorder %s117, %s118
    %p132 = scmp.eq.s32.totalorder %s16, 1
    %p133 = por %p131, %p132
    %p135 = scmp.ne.s32.totalorder %s118, %s134
    %p136 = scmp.eq.s32.totalorder %s16, 0
    %p137 = por %p135, %p136
    %p138 = scmp.le.s32.totalorder 1, %s10
    %p139 = scmp.lt.s32.totalorder %s10, 3
    %p140 = pnand %p138, %p139
    %p141 = pneg %p140
    // Predicated region
    $region9: #{resnet50_basic_block.7} parent=5 // pred_check
      _
    $region10: #{resnet50_basic_block.7} parent=5 // pred_check_branch
      %143 = sbr.rel (%p140) target = $region12
    $region11: #{resnet50_basic_block.7} parent=5 // pred_region
      %s144 = ssub.s32 %s10, 1
      // Predicated region
      $region13: #{resnet50_basic_block.7} parent=11 // pred_check
        %p145 = pneg %p83
      $region14: #{resnet50_basic_block.7} parent=11 // pred_check_branch
        %147 = sbr.rel (%p145) target = $region16
      $region15: #{resnet50_basic_block.7} parent=11 // pred_region
        _
      $region16: #{resnet50_basic_block.7} parent=11 // pred_fallthru
        _
      // Predicated region
      $region17: #{resnet50_basic_block.7} parent=11 // pred_check
        %p148 = pneg %p104
      $region18: #{resnet50_basic_block.7} parent=11 // pred_check_branch
        %150 = sbr.rel (%p148) target = $region20
      $region19: #{resnet50_basic_block.7} parent=11 // pred_region
        _
      $region20: #{resnet50_basic_block.7} parent=11 // pred_fallthru
        _
    $region12: #{resnet50_basic_block.7} parent=5 // pred_fallthru
      _
    %p151 = scmp.lt.s32.totalorder %s10, 2
    // Predicated region
    $region21: #{resnet50_basic_block.7} parent=5 // pred_check
      %p152 = pneg %p151
    $region22: #{resnet50_basic_block.7} parent=5 // pred_check_branch
      %154 = sbr.rel (%p152) target = $region24
    $region23: #{resnet50_basic_block.7} parent=5 // pred_region
      // Predicated region
      $region25: #{resnet50_basic_block.7} parent=23 // pred_check
        %p155 = pneg %p30
      $region26: #{resnet50_basic_block.7} parent=23 // pred_check_branch
        %157 = sbr.rel (%p155) target = $region28
      $region27: #{resnet50_basic_block.7} parent=23 // pred_region
        %p158 = scmp.lt.s32.totalorder %s10, 1
        %s159 = scalar_select %p158, %s10, 1
        %s160 = smul.addr %s159, 3
        %s161 = smul.addr %s160, 2
        %s162 = scalar_lea.vmem %s0, %s161
      $region28: #{resnet50_basic_block.7} parent=23 // pred_fallthru
        _
      // Predicated region
      $region29: #{resnet50_basic_block.7} parent=23 // pred_check
        %p163 = pneg %p56
      $region30: #{resnet50_basic_block.7} parent=23 // pred_check_branch
        %165 = sbr.rel (%p163) target = $region32
      $region31: #{resnet50_basic_block.7} parent=23 // pred_region
        %p166 = scmp.lt.s32.totalorder %s10, 1
        %s167 = scalar_select %p166, %s10, 1
        %s168 = smul.addr %s167, 3
        %s169 = smul.addr %s168, 2
        %s170 = scalar_lea.vmem %s1, %s169
      $region32: #{resnet50_basic_block.7} parent=23 // pred_fallthru
        _
    $region24: #{resnet50_basic_block.7} parent=5 // pred_fallthru
      _
    %p171 = scmp.le.s32.totalorder 1, %s10
    %p172 = scmp.lt.s32.totalorder %s10, 3
    %p173 = pnand %p171, %p172
    %p174 = pneg %p173
    // Predicated region
    $region33: #{resnet50_basic_block.7} parent=5 // pred_check
      _
    $region34: #{resnet50_basic_block.7} parent=5 // pred_check_branch
      %176 = sbr.rel (%p173) target = $region36
    $region35: #{resnet50_basic_block.7} parent=5 // pred_region
      %s177 = ssub.s32 %s10, 1
      %p178 = scmp.lt.s32.totalorder %s15, 1
      %s179 = scalar_select %p178, %s15, 1
      %s180 = smul.addr %s179, 3
      %s181 = smul.addr %s180, 2
      %s182 = scalar_lea.vmem %s0, %s181
      %p183 = pneg %p36
      %p184 = pneg %p33
      %p185 = scmp.lt.s32.totalorder %s15, 1
      %s186 = scalar_select %p185, %s15, 1
      %s187 = smul.addr %s186, 3
      %s188 = smul.addr %s187, 2
      %s189 = scalar_lea.vmem %s1, %s188
      %p190 = pneg %p62
      %p191 = pneg %p59
      %p192 = pneg %p83
      %p193 = pneg %p80
      %p194 = pneg %p104
      %p195 = pneg %p101
      %p196 = pneg %p130
      %p197 = pneg %p127
      %p198 = scmp.lt.s32.totalorder %s15, 1
      %s199 = scalar_select %p198, %s15, 1
      %s200 = smul.addr %s199, 3
      %s201 = smul.addr %s200, 4
      %s202 = scalar_lea.vmem %s4, %s201
      %p203 = scmp.lt.s32.totalorder %s15, 1
      %s204 = scalar_select %p203, %s15, 1
      %s205 = smul.addr %s204, 3
      %s206 = smul.addr %s205, 2
      %s207 = scalar_lea.vmem %s0, %s206
      %p208 = scmp.lt.s32.totalorder %s15, 1
      %s209 = scalar_select %p208, %s15, 1
      %s210 = smul.addr %s209, 3
      %s211 = smul.addr %s210, 2
      %s212 = scalar_lea.vmem %s1, %s211
      %p213 = scmp.lt.s32.totalorder %s15, 1
      %s214 = scalar_select %p213, %s15, 1
      %s215 = smul.addr %s214, 3
      %s216 = smul.addr %s215, 4
      %s217 = scalar_lea.vmem %s4, %s216
      %v218 = vld [vmem:[%s207] sm:$0x3f]
      %v219 = vld [vmem:[%s2] sm:$0xf]
      %v220 = vunpack.c.l.bf16 %v218
      %v221 = vunpack.c.h.bf16 %v218
      %223 = vset.pattern.permute.xlu0 0
      %224 = vperm.xlu0 %223, %v219
      %v225 = vpop.permute.xlu0 %224
      %v227 = vunpack.c.l.s4 839922192
      %v228 = vunpack.c.0.s8 %v227
      %v229 = vperm.slane %v225, %v228
      %v231 = vmul.f32 %v220, %v229
      %v232 = vmul.f32 %v221, %v229
      %v233 = vld [vmem:[%s3] sm:$0xf]
      %235 = vset.pattern.permute.xlu0 0
      %236 = vperm.xlu0 %235, %v233
      %v237 = vpop.permute.xlu0 %236
      %v239 = vunpack.c.l.s4 839922192
      %v240 = vunpack.c.0.s8 %v239
      %v241 = vperm.slane %v237, %v240
      %v243 = vadd.f32 %v231, %v241
      %v244 = vadd.f32 %v232, %v241
      %v245 = vld [vmem:[%s212] sm:$0x3f]
      %v246 = vunpack.c.l.bf16 %v245
      %v247 = vunpack.c.h.bf16 %v245
      %v248 = vadd.f32 %v243, %v246
      %v249 = vadd.f32 %v244, %v247
      %v250 = vmax.f32 %v248, 0.0
      %v251 = vmax.f32 %v249, 0.0
      %252 = vst [vmem:[%s217] sm:$0xff] %v250
      %vm253 = vcmask 551936
      %254 = vst.msk [vmem:[%s217 + $0x8] sm:$0xf] %vm253, %v251
      %p255 = scmp.lt.s32.totalorder %s15, 1
      %s256 = scalar_select %p255, %s15, 1
      %s257 = smul.addr %s256, 3
      %s258 = smul.addr %s257, 4
      %s259 = scalar_lea.vmem %s4, %s258
      // Predicated region
      $region37: #{resnet50_basic_block.7} parent=35 // pred_check
        %p260 = pneg %p127
      $region38: #{resnet50_basic_block.7} parent=35 // pred_check_branch
        %262 = sbr.rel (%p260) target = $region40
      $region39: #{resnet50_basic_block.7} parent=35 // pred_region
        _
      $region40: #{resnet50_basic_block.7} parent=35 // pred_fallthru
        _
    $region36: #{resnet50_basic_block.7} parent=5 // pred_fallthru
      _
    %p263 = scmp.le.s32.totalorder 2, %s10
    // Predicated region
    $region41: #{resnet50_basic_block.7} parent=5 // pred_check
      %p264 = pneg %p263
    $region42: #{resnet50_basic_block.7} parent=5 // pred_check_branch
      %266 = sbr.rel (%p264) target = $region44
    $region43: #{resnet50_basic_block.7} parent=5 // pred_region
      %s267 = ssub.s32 %s10, 2
      // Predicated region
      $region45: #{resnet50_basic_block.7} parent=43 // pred_check
        %p268 = pneg %p133
      $region46: #{resnet50_basic_block.7} parent=43 // pred_check_branch
        %270 = sbr.rel (%p268) target = $region48
      $region47: #{resnet50_basic_block.7} parent=43 // pred_region
        %p271 = scmp.lt.s32.totalorder %s16, 1
        %s272 = scalar_select %p271, %s16, 1
        %s273 = smul.addr %s272, 3
        %s274 = smul.addr %s273, 4
        %s275 = scalar_lea.vmem %s4, %s274
      $region48: #{resnet50_basic_block.7} parent=43 // pred_fallthru
        _
    $region44: #{resnet50_basic_block.7} parent=5 // pred_fallthru
      _
  $region6: #{resnet50_basic_block.7} parent=0 // loop_footer
    %s14 = sadd.s32 1, %s10
  $region7: #{resnet50_basic_block.7} parent=0 // loop_footer_branch
    %9 = sbr.rel target = $region3
  $region8: #{resnet50_basic_block.7} parent=0 // loop_exit
    _

// kernel: resnet50_basic_block.5
$region0: #{resnet50_basic_block.5}
  #allocation0 [shape = 'u32[]', space=smem, size = 0x4, offset = 0x4, fixed_abs, tag = 'smem constant byte address 0x4 - core index']
  #allocation1 [shape = 'u32[72,128]{1,0:T(1,128)}', space=vmem, size = 0x9000, scoped, tag = 'internal scratch']
  #allocation2 [shape = 'bf16[8,362]{1,0:T(8,128)(2,1)}', space=vmem, size = 0x1800, scoped, tag = 'scratch operand']
  %s0 = inlined_call_operand.vmem [shape: bf16[2,8,324], index: 0, kind: input, shape index: {}]
  %s1 = inlined_call_operand.vmem [shape: f32[1,324], index: 1, kind: input, shape index: {}]
  %s2 = inlined_call_operand.vmem [shape: f32[8,1], index: 2, kind: input, shape index: {}]
  %s3 = inlined_call_operand.vmem [shape: f32[8,1], index: 3, kind: input, shape index: {}]
  %s4 = inlined_call_operand.vmem [shape: bf16[9,8,8], index: 4, kind: input, shape index: {}]
  %s5 = inlined_call_operand.vmem [shape: bf16[2,8,324], index: 5, kind: output, shape index: {0}]
  %s6 = inlined_call_operand.vmem [shape: f32[2,8,1], index: 6, kind: output, shape index: {1}]
  %s7 = inlined_call_operand.vmem [shape: f32[2,8,1], index: 7, kind: output, shape index: {2}]
  %8 = xla_tuple %s5, %s6, %s7
  %s9 = sld [smem:[#allocation0]]
  $region73: #{resnet50_basic_block.5} parent=0
    _
  %s11 = ssub.s32 1, %s9
  %s12 = scalar_select 0, %s11, %s9
  loop: start=0, step=1, limit=4
  $region2: #{resnet50_basic_block.5} parent=0 // loop_pre_header
    _
  $region3: #{resnet50_basic_block.5} parent=0 // loop_header
    %s14 = sphi 0, %s18
    %p15 = scmp.ge.s32.totalorder %s14, 4
    %s21 = sphi 0, %s33
    %s22 = sphi 0, %s29
    %s23 = sphi 0, %s21
    %s24 = sphi 0, %s22
    %s25 = sphi 0, %s23
    %s26 = sphi 0, %s24
    %s38 = sphi 0, %s40
    %s41 = sphi 0, %s38
    %s42 = sphi 0, %s41
    %s58 = sphi 0, %s42
    %s62 = sphi 0, %s62
    %s64 = sphi 0, %s62
    %s65 = sphi 0, %s64
    %s79 = sphi 0, %s65
    %s83 = sphi 0, %s83
    %s85 = sphi 0, %s83
    %s86 = sphi 0, %s85
    %s100 = sphi 0, %s86
    %s104 = sphi 0, %s104
    %s106 = sphi 0, %s104
    %s107 = sphi 0, %s106
    %s121 = sphi 0, %s107
    %s125 = sphi 0, %s125
    %s127 = sphi 0, %s125
    %s128 = sphi 0, %s127
    %s142 = sphi 0, %s128
    %s150 = sphi 0, %s152
    %s153 = sphi 0, %s150
    %s154 = sphi 0, %s153
    %s170 = sphi 0, %s154
    %s176 = sphi 0, %s178
    %s179 = sphi 0, %s176
    %s180 = sphi 0, %s179
    %s196 = sphi 0, %s180
    %s202 = sphi 0, %s204
    %s205 = sphi 0, %s202
    %s206 = sphi 0, %s205
    %s222 = sphi 0, %s206
  $region4: #{resnet50_basic_block.5} parent=0 // loop_header_branch
    %17 = sbr.rel (%p15) target = $region8
  $region5: #{resnet50_basic_block.5} parent=0 // loop_body
    %s19 = ssub.s32 %s14, 1
    %s20 = ssub.s32 %s14, 2
    %s27 = sadd.s32 1, %s22
    %p28 = scmp.ge.s32.totalorder %s27, 1
    %s29 = scalar_select %p28, 0, %s27
    %s30 = sadd.s32 1, %s21
    %s31 = scalar_select %p28, %s30, %s21
    %p32 = scmp.ge.s32.totalorder %s31, 2
    %s33 = scalar_select %p32, 0, %s31
    %s34 = sadd.s32 %s21, %s22
    %s35 = sadd.s32 %s33, %s29
    %s36 = ssub.s32 %s34, %s35
    %p37 = scmp.eq.s32.totalorder %s36, 0
    %s39 = sadd.s32 %s38, 1
    %s40 = scalar_select %p37, %s38, %s39
    %p43 = pneg %p37
    %p44 = scmp.eq.s32.totalorder %s14, 1
    %p45 = por %p43, %p44
    %p46 = scmp.ne.s32.totalorder %s38, %s41
    %p47 = scmp.eq.s32.totalorder %s14, 0
    %p48 = por %p46, %p47
    %p49 = scmp.ne.s32.totalorder %s38, %s41
    %p50 = scmp.eq.s32.totalorder %s19, 1
    %p51 = por %p49, %p50
    %p52 = scmp.ne.s32.totalorder %s41, %s42
    %p53 = scmp.eq.s32.totalorder %s19, 0
    %p54 = por %p52, %p53
    %p55 = scmp.ne.s32.totalorder %s41, %s42
    %p56 = scmp.eq.s32.totalorder %s20, 1
    %p57 = por %p55, %p56
    %p59 = scmp.ne.s32.totalorder %s42, %s58
    %p60 = scmp.eq.s32.totalorder %s20, 0
    %p61 = por %p59, %p60
    %s63 = sadd.s32 %s62, 1
    %p66 = scmp.eq.s32.totalorder %s14, 1
    %p67 = scmp.ne.s32.totalorder %s62, %s64
    %p68 = scmp.eq.s32.totalorder %s14, 0
    %p69 = por %p67, %p68
    %p70 = scmp.ne.s32.totalorder %s62, %s64
    %p71 = scmp.eq.s32.totalorder %s19, 1
    %p72 = por %p70, %p71
    %p73 = scmp.ne.s32.totalorder %s64, %s65
    %p74 = scmp.eq.s32.totalorder %s19, 0
    %p75 = por %p73, %p74
    %p76 = scmp.ne.s32.totalorder %s64, %s65
    %p77 = scmp.eq.s32.totalorder %s20, 1
    %p78 = por %p76, %p77
    %p80 = scmp.ne.s32.totalorder %s65, %s79
    %p81 = scmp.eq.s32.totalorder %s20, 0
    %p82 = por %p80, %p81
    %s84 = sadd.s32 %s83, 1
    %p87 = scmp.eq.s32.totalorder %s14, 1
    %p88 = scmp.ne.s32.totalorder %s83, %s85
    %p89 = scmp.eq.s32.totalorder %s14, 0
    %p90 = por %p88, %p89
    %p91 = scmp.ne.s32.totalorder %s83, %s85
    %p92 = scmp.eq.s32.totalorder %s19, 1
    %p93 = por %p91, %p92
    %p94 = scmp.ne.s32.totalorder %s85, %s86
    %p95 = scmp.eq.s32.totalorder %s19, 0
    %p96 = por %p94, %p95
    %p97 = scmp.ne.s32.totalorder %s85, %s86
    %p98 = scmp.eq.s32.totalorder %s20, 1
    %p99 = por %p97, %p98
    %p101 = scmp.ne.s32.totalorder %s86, %s100
    %p102 = scmp.eq.s32.totalorder %s20, 0
    %p103 = por %p101, %p102
    %s105 = sadd.s32 %s104, 1
    %p108 = scmp.eq.s32.totalorder %s14, 1
    %p109 = scmp.ne.s32.totalorder %s104, %s106
    %p110 = scmp.eq.s32.totalorder %s14, 0
    %p111 = por %p109, %p110
    %p112 = scmp.ne.s32.totalorder %s104, %s106
    %p113 = scmp.eq.s32.totalorder %s19, 1
    %p114 = por %p112, %p113
    %p115 = scmp.ne.s32.totalorder %s106, %s107
    %p116 = scmp.eq.s32.totalorder %s19, 0
    %p117 = por %p115, %p116
    %p118 = scmp.ne.s32.totalorder %s106, %s107
    %p119 = scmp.eq.s32.totalorder %s20, 1
    %p120 = por %p118, %p119
    %p122 = scmp.ne.s32.totalorder %s107, %s121
    %p123 = scmp.eq.s32.totalorder %s20, 0
    %p124 = por %p122, %p123
    %s126 = sadd.s32 %s125, 1
    %p129 = scmp.eq.s32.totalorder %s14, 1
    %p130 = scmp.ne.s32.totalorder %s125, %s127
    %p131 = scmp.eq.s32.totalorder %s14, 0
    %p132 = por %p130, %p131
    %p133 = scmp.ne.s32.totalorder %s125, %s127
    %p134 = scmp.eq.s32.totalorder %s19, 1
    %p135 = por %p133, %p134
    %p136 = scmp.ne.s32.totalorder %s127, %s128
    %p137 = scmp.eq.s32.totalorder %s19, 0
    %p138 = por %p136, %p137
    %p139 = scmp.ne.s32.totalorder %s127, %s128
    %p140 = scmp.eq.s32.totalorder %s20, 1
    %p141 = por %p139, %p140
    %p143 = scmp.ne.s32.totalorder %s128, %s142
    %p144 = scmp.eq.s32.totalorder %s20, 0
    %p145 = por %p143, %p144
    %s146 = sadd.s32 %s21, %s22
    %s147 = sadd.s32 %s33, %s29
    %s148 = ssub.s32 %s146, %s147
    %p149 = scmp.eq.s32.totalorder %s148, 0
    %s151 = sadd.s32 %s150, 1
    %s152 = scalar_select %p149, %s150, %s151
    %p155 = pneg %p149
    %p156 = scmp.eq.s32.totalorder %s14, 1
    %p157 = por %p155, %p156
    %p158 = scmp.ne.s32.totalorder %s150, %s153
    %p159 = scmp.eq.s32.totalorder %s14, 0
    %p160 = por %p158, %p159
    %p161 = scmp.ne.s32.totalorder %s150, %s153
    %p162 = scmp.eq.s32.totalorder %s19, 1
    %p163 = por %p161, %p162
    %p164 = scmp.ne.s32.totalorder %s153, %s154
    %p165 = scmp.eq.s32.totalorder %s19, 0
    %p166 = por %p164, %p165
    %p167 = scmp.ne.s32.totalorder %s153, %s154
    %p168 = scmp.eq.s32.totalorder %s20, 1
    %p169 = por %p167, %p168
    %p171 = scmp.ne.s32.totalorder %s154, %s170
    %p172 = scmp.eq.s32.totalorder %s20, 0
    %p173 = por %p171, %p172
    %s174 = ssub.s32 %s21, %s33
    %p175 = scmp.eq.s32.totalorder %s174, 0
    %s177 = sadd.s32 %s176, 1
    %s178 = scalar_select %p175, %s176, %s177
    %p181 = pneg %p175
    %p182 = scmp.eq.s32.totalorder %s14, 1
    %p183 = por %p181, %p182
    %p184 = scmp.ne.s32.totalorder %s176, %s179
    %p185 = scmp.eq.s32.totalorder %s14, 0
    %p186 = por %p184, %p185
    %p187 = scmp.ne.s32.totalorder %s176, %s179
    %p188 = scmp.eq.s32.totalorder %s19, 1
    %p189 = por %p187, %p188
    %p190 = scmp.ne.s32.totalorder %s179, %s180
    %p191 = scmp.eq.s32.totalorder %s19, 0
    %p192 = por %p190, %p191
    %p193 = scmp.ne.s32.totalorder %s179, %s180
    %p194 = scmp.eq.s32.totalorder %s20, 1
    %p195 = por %p193, %p194
    %p197 = scmp.ne.s32.totalorder %s180, %s196
    %p198 = scmp.eq.s32.totalorder %s20, 0
    %p199 = por %p197, %p198
    %s200 = ssub.s32 %s21, %s33
    %p201 = scmp.eq.s32.totalorder %s200, 0
    %s203 = sadd.s32 %s202, 1
    %s204 = scalar_select %p201, %s202, %s203
    %p207 = pneg %p201
    %p208 = scmp.eq.s32.totalorder %s14, 1
    %p209 = por %p207, %p208
    %p210 = scmp.ne.s32.totalorder %s202, %s205
    %p211 = scmp.eq.s32.totalorder %s14, 0
    %p212 = por %p210, %p211
    %p213 = scmp.ne.s32.totalorder %s202, %s205
    %p214 = scmp.eq.s32.totalorder %s19, 1
    %p215 = por %p213, %p214
    %p216 = scmp.ne.s32.totalorder %s205, %s206
    %p217 = scmp.eq.s32.totalorder %s19, 0
    %p218 = por %p216, %p217
    %p219 = scmp.ne.s32.totalorder %s205, %s206
    %p220 = scmp.eq.s32.totalorder %s20, 1
    %p221 = por %p219, %p220
    %p223 = scmp.ne.s32.totalorder %s206, %s222
    %p224 = scmp.eq.s32.totalorder %s20, 0
    %p225 = por %p223, %p224
    %p226 = scmp.le.s32.totalorder 1, %s14
    %p227 = scmp.lt.s32.totalorder %s14, 3
    %p228 = pnand %p226, %p227
    %p229 = pneg %p228
    // Predicated region
    $region9: #{resnet50_basic_block.5} parent=5 // pred_check
      _
    $region10: #{resnet50_basic_block.5} parent=5 // pred_check_branch
      %231 = sbr.rel (%p228) target = $region12
    $region11: #{resnet50_basic_block.5} parent=5 // pred_region
      %s232 = ssub.s32 %s14, 1
      // Predicated region
      $region13: #{resnet50_basic_block.5} parent=11 // pred_check
        %p233 = pneg %p75
      $region14: #{resnet50_basic_block.5} parent=11 // pred_check_branch
        %235 = sbr.rel (%p233) target = $region16
      $region15: #{resnet50_basic_block.5} parent=11 // pred_region
        _
      $region16: #{resnet50_basic_block.5} parent=11 // pred_fallthru
        _
      // Predicated region
      $region17: #{resnet50_basic_block.5} parent=11 // pred_check
        %p236 = pneg %p96
      $region18: #{resnet50_basic_block.5} parent=11 // pred_check_branch
        %238 = sbr.rel (%p236) target = $region20
      $region19: #{resnet50_basic_block.5} parent=11 // pred_region
        _
      $region20: #{resnet50_basic_block.5} parent=11 // pred_fallthru
        _
      // Predicated region
      $region21: #{resnet50_basic_block.5} parent=11 // pred_check
        %p239 = pneg %p117
      $region22: #{resnet50_basic_block.5} parent=11 // pred_check_branch
        %241 = sbr.rel (%p239) target = $region24
      $region23: #{resnet50_basic_block.5} parent=11 // pred_region
        _
      $region24: #{resnet50_basic_block.5} parent=11 // pred_fallthru
        _
      // Predicated region
      $region25: #{resnet50_basic_block.5} parent=11 // pred_check
        %p242 = pneg %p138
      $region26: #{resnet50_basic_block.5} parent=11 // pred_check_branch
        %244 = sbr.rel (%p242) target = $region28
      $region27: #{resnet50_basic_block.5} parent=11 // pred_region
        _
      $region28: #{resnet50_basic_block.5} parent=11 // pred_fallthru
        _
    $region12: #{resnet50_basic_block.5} parent=5 // pred_fallthru
      _
    %p245 = scmp.lt.s32.totalorder %s14, 2
    // Predicated region
    $region29: #{resnet50_basic_block.5} parent=5 // pred_check
      %p246 = pneg %p245
    $region30: #{resnet50_basic_block.5} parent=5 // pred_check_branch
      %248 = sbr.rel (%p246) target = $region32
    $region31: #{resnet50_basic_block.5} parent=5 // pred_region
      // Predicated region
      $region33: #{resnet50_basic_block.5} parent=31 // pred_check
        %p249 = pneg %p48
      $region34: #{resnet50_basic_block.5} parent=31 // pred_check_branch
        %251 = sbr.rel (%p249) target = $region36
      $region35: #{resnet50_basic_block.5} parent=31 // pred_region
        %s252 = sadd.s32 %s21, %s22
        %p253 = scmp.lt.s32.totalorder %s252, 1
        %s254 = scalar_select %p253, %s252, 1
        %s255 = smul.addr %s254, 3
        %s256 = smul.addr %s255, 4
        %s257 = scalar_lea.vmem %s0, %s256
        %s258 = sadd.s32 %s21, %s22
      $region36: #{resnet50_basic_block.5} parent=31 // pred_fallthru
        _
    $region32: #{resnet50_basic_block.5} parent=5 // pred_fallthru
      _
    %p259 = scmp.le.s32.totalorder 1, %s14
    %p260 = scmp.lt.s32.totalorder %s14, 3
    %p261 = pnand %p259, %p260
    %p262 = pneg %p261
    // Predicated region
    $region37: #{resnet50_basic_block.5} parent=5 // pred_check
      _
    $region38: #{resnet50_basic_block.5} parent=5 // pred_check_branch
      %264 = sbr.rel (%p261) target = $region40
    $region39: #{resnet50_basic_block.5} parent=5 // pred_region
      %s265 = ssub.s32 %s14, 1
      %s266 = sadd.s32 %s23, %s24
      %p267 = scmp.lt.s32.totalorder %s266, 1
      %s268 = scalar_select %p267, %s266, 1
      %s269 = smul.addr %s268, 3
      %s270 = smul.addr %s269, 4
      %s271 = scalar_lea.vmem %s0, %s270
      %p272 = pneg %p54
      %p273 = pneg %p51
      %p274 = pneg %p75
      %p275 = pneg %p72
      %p276 = pneg %p96
      %p277 = pneg %p93
      %p278 = pneg %p117
      %p279 = pneg %p114
      %p280 = pneg %p138
      %p281 = pneg %p135
      %p282 = pneg %p166
      %p283 = pneg %p163
      %s284 = sadd.s32 %s23, %s24
      %p285 = scmp.lt.s32.totalorder %s284, 1
      %s286 = scalar_select %p285, %s284, 1
      %s287 = smul.addr %s286, 3
      %s288 = smul.addr %s287, 4
      %s289 = scalar_lea.vmem %s5, %s288
      %p290 = pneg %p192
      %p291 = pneg %p189
      %p292 = scmp.lt.s32.totalorder %s23, 1
      %s293 = scalar_select %p292, %s23, 1
      %s294 = smul.addr %s293, 8
      %s295 = scalar_lea.vmem %s6, %s294
      %p296 = pneg %p218
      %p297 = pneg %p215
      %p298 = scmp.lt.s32.totalorder %s23, 1
      %s299 = scalar_select %p298, %s23, 1
      %s300 = smul.addr %s299, 8
      %s301 = scalar_lea.vmem %s7, %s300
      %s302 = sadd.s32 %s23, %s24
      %p303 = scmp.lt.s32.totalorder %s302, 1
      %s304 = scalar_select %p303, %s302, 1
      %s305 = smul.addr %s304, 3
      %s306 = smul.addr %s305, 4
      %s307 = scalar_lea.vmem %s0, %s306
      %s308 = sadd.s32 %s23, %s24
      %s309 = sadd.s32 %s23, %s24
      %p310 = scmp.lt.s32.totalorder %s309, 1
      %s311 = scalar_select %p310, %s309, 1
      %s312 = smul.addr %s311, 3
      %s313 = smul.addr %s312, 4
      %s314 = scalar_lea.vmem %s5, %s313
      %s315 = sadd.s32 %s23, %s24
      %p316 = scmp.lt.s32.totalorder %s23, 1
      %s317 = scalar_select %p316, %s23, 1
      %s318 = smul.addr %s317, 8
      %s319 = scalar_lea.vmem %s6, %s318
      %p320 = scmp.lt.s32.totalorder %s23, 1
      %s321 = scalar_select %p320, %s23, 1
      %s322 = smul.addr %s321, 8
      %s323 = scalar_lea.vmem %s7, %s322
      %p325 = scmp.eq.s32.totalorder %s24, 0
      // Predicated region
      $region41: #{resnet50_basic_block.5} parent=39 // pred_check
        %p326 = pneg %p325
      $region42: #{resnet50_basic_block.5} parent=39 // pred_check_branch
        %328 = sbr.rel (%p326) target = $region44
      $region43: #{resnet50_basic_block.5} parent=39 // pred_region
        %vm329 = vcmask 7168
        %330 = vst.msk [vmem:[%s319] sm:$0xff] %vm329, 0.0
        %331 = vst.msk [vmem:[%s323] sm:$0xff] %vm329, 0.0
        %332 = vst [vmem:[#allocation2] sm:$0xff] 0
        %vm333 = vcmask 863232
        %334 = vst.msk [vmem:[#allocation2 + $0x8] sm:$0xf] %vm333, 0
      $region44: #{resnet50_basic_block.5} parent=39 // pred_fallthru
        _
      %v335 = vld [vmem:[%s1] sm:$0x7]
      %v336 = vld [vmem:[%s307] sm:$0xff]
      %v337 = vld [vmem:[%s307 + $0x8] sm:$0xf]
      %v338 = vld [vmem:[%s2] sm:$0xff]
      %v339 = vunpack.c.l.bf16 %v336
      %v340 = vunpack.c.h.bf16 %v336
      %v341 = vunpack.c.l.bf16 %v337
      %343 = vset.pattern.permute.xlu0 0
      %344 = vperm.xlu0 %343, %v338
      %v345 = vpop.permute.xlu0 %344
      %v347 = vmul.f32 %v339, %v345
      %v348 = vmul.f32 %v340, %v345
      %v349 = vmul.f32 %v341, %v345
      %v350 = vld [vmem:[%s3] sm:$0xff]
      %352 = vset.pattern.permute.xlu0 0
      %353 = vperm.xlu0 %352, %v350
      %v354 = vpop.permute.xlu0 %353
      %v356 = vadd.f32 %v347, %v354
      %v357 = vadd.f32 %v348, %v354
      %v358 = vadd.f32 %v349, %v354
      %v359 = vmax.f32 %v356, 0.0
      %v360 = vmax.f32 %v357, 0.0
      %v361 = vmax.f32 %v358, 0.0
      %v363 = vperm.slane %v335, 0
      %v364 = vperm.slane %v335, 1
      %v365 = vperm.slane %v335, 2
      %v369 = vmul.f32 %v359, %v363
      %v370 = vmul.f32 %v360, %v364
      %v371 = vmul.f32 %v361, %v365
      %v372 = vpack.c.bf16 %v370, %v369
      %v373 = vpack.c.bf16 %v371, %v371
      %376 = vrot.lane.b32.xlu0 %v372, 19
      %v377 = vpop.permute.xlu0 %376
      %378 = vrot.lane.b32.xlu0 %v373, 19
      %v379 = vpop.permute.xlu0 %378
      %v380 = vrot.slane %v377, 4
      %vm381 = vcmask 154624
      %v382 = vsel %vm381, %v380, %v377
      %v383 = vsel %vm381, %v380, %v379
      %vm386 = vcmask 1043608
      %vm387 = vcmask 1047556
      %vm388 = vmor %vm387, %vm386
      %389 = vst.msk [vmem:[#allocation2] sm:$0xff] %vm388, %v382
      %vm390 = vcmask 707584
      %391 = vst.msk [vmem:[#allocation2 + $0x8] sm:$0xf] %vm390, %v383
      %v392 = vld [vmem:[#allocation2] sm:$0xff]
      %v393 = vld [vmem:[#allocation2 + $0x8] sm:$0xf]
      %v394 = vld [vmem:[%s4] sm:$0xf]
      %s395 = scalar_lea.vmem %s4, 4
      %v396 = vld [vmem:[%s395] sm:$0xf]
      %v399 = vunpack.c.l.b16 %v392
      %v400 = vunpack.c.h.b16 %v392
      %v401 = vunpack.c.l.b16 %v393
      %v402 = vpack.c.b16 %v399, %v399
      %v403 = vpack.c.b16 %v400, %v400
      %v404 = vpack.c.b16 %v401, %v401
      %405 = vrot.lane.b32.xlu0 %v402, 127
      %v406 = vpop.permute.xlu0 %405
      %407 = vrot.lane.b32.xlu0 %v403, 127
      %v408 = vpop.permute.xlu0 %407
      %409 = vrot.lane.b32.xlu0 %v404, 127
      %v410 = vpop.permute.xlu0 %409
      %vm411 = vcmask 1039360
      %v412 = vsel %vm411, %v406, %v408
      %v413 = vsel %vm411, %v408, %v410
      %vm414 = vcmask 64512
      %v416 = vsel %vm414, %v396, 0
      %vm418 = vcmask 1043456
      %v420 = vsel %vm418, %v412, 0
      %v423 = vsel %vm418, %v413, 0
      %v426 = vsel %vm418, %v410, 0
      %428 = vmatpush.bf16.msra.mxu0 0
      %429 = vmatpush.bf16.msra.mxu0 0
      %430 = vmatpush.bf16.msra.mxu0 0
      %431 = vmatpush.bf16.msra.mxu0 0
      %432 = vmatpush.bf16.msra.mxu0 0
      %433 = vmatpush.bf16.msra.mxu0 0
      %434 = vmatpush.bf16.msra.mxu0 0
      %435 = vmatpush.bf16.msra.mxu0 %v420
      %436 = vmatmul.bf16.gmra.mxu0 %v416
      %v437 = vpop.f32.mrf.mxu0
      %v438 = vadd.f32 0.0, %v437
      %v439 = vpop.f32.mrf.mxu0
      %440 = vdwg.mxu0
      %441 = vmatpush.bf16.msra.mxu0 0
      %442 = vmatpush.bf16.msra.mxu0 0
      %443 = vmatpush.bf16.msra.mxu0 0
      %444 = vmatpush.bf16.msra.mxu0 0
      %445 = vmatpush.bf16.msra.mxu0 0
      %446 = vmatpush.bf16.msra.mxu0 0
      %447 = vmatpush.bf16.msra.mxu0 0
      %448 = vmatpush.bf16.msra.mxu0 %v423
      %449 = vmatmul.bf16.gmra.mxu0 %v416
      %v450 = vpop.f32.mrf.mxu0
      %v451 = vadd.f32 0.0, %v450
      %v452 = vpop.f32.mrf.mxu0
      %453 = vdwg.mxu0
      %454 = vmatpush.bf16.msra.mxu0 0
      %455 = vmatpush.bf16.msra.mxu0 0
      %456 = vmatpush.bf16.msra.mxu0 0
      %457 = vmatpush.bf16.msra.mxu0 0
      %458 = vmatpush.bf16.msra.mxu0 0
      %459 = vmatpush.bf16.msra.mxu0 0
      %460 = vmatpush.bf16.msra.mxu0 0
      %461 = vmatpush.bf16.msra.mxu0 %v426
      %462 = vmatmul.bf16.gmra.mxu0 %v416
      %v463 = vpop.f32.mrf.mxu0
      %v464 = vadd.f32 0.0, %v463
      %v465 = vpop.f32.mrf.mxu0
      %466 = vdwg.mxu0
      %v468 = vsel %vm414, %v394, 0
      %v471 = vsel %vm418, %v402, 0
      %v474 = vsel %vm418, %v403, 0
      %v477 = vsel %vm418, %v404, 0
      %479 = vmatpush.bf16.msra.mxu0 0
      %480 = vmatpush.bf16.msra.mxu0 0
      %481 = vmatpush.bf16.msra.mxu0 0
      %482 = vmatpush.bf16.msra.mxu0 0
      %483 = vmatpush.bf16.msra.mxu0 0
      %484 = vmatpush.bf16.msra.mxu0 0
      %485 = vmatpush.bf16.msra.mxu0 0
      %486 = vmatpush.bf16.msra.mxu0 %v471
      %487 = vmatmul.bf16.gmra.mxu0 %v468
      %v488 = vpop.f32.mrf.mxu0
      %v489 = vadd.f32 %v438, %v488
      %v490 = vpop.f32.mrf.mxu0
      %491 = vdwg.mxu0
      %492 = vmatpush.bf16.msra.mxu0 0
      %493 = vmatpush.bf16.msra.mxu0 0
      %494 = vmatpush.bf16.msra.mxu0 0
      %495 = vmatpush.bf16.msra.mxu0 0
      %496 = vmatpush.bf16.msra.mxu0 0
      %497 = vmatpush.bf16.msra.mxu0 0
      %498 = vmatpush.bf16.msra.mxu0 0
      %499 = vmatpush.bf16.msra.mxu0 %v474
      %500 = vmatmul.bf16.gmra.mxu0 %v468
      %v501 = vpop.f32.mrf.mxu0
      %v502 = vadd.f32 %v451, %v501
      %v503 = vpop.f32.mrf.mxu0
      %504 = vdwg.mxu0
      %505 = vmatpush.bf16.msra.mxu0 0
      %506 = vmatpush.bf16.msra.mxu0 0
      %507 = vmatpush.bf16.msra.mxu0 0
      %508 = vmatpush.bf16.msra.mxu0 0
      %509 = vmatpush.bf16.msra.mxu0 0
      %510 = vmatpush.bf16.msra.mxu0 0
      %511 = vmatpush.bf16.msra.mxu0 0
      %512 = vmatpush.bf16.msra.mxu0 %v477
      %513 = vmatmul.bf16.gmra.mxu0 %v468
      %v514 = vpop.f32.mrf.mxu0
      %v515 = vadd.f32 %v464, %v514
      %v516 = vpop.f32.mrf.mxu0
      %517 = vdwg.mxu0
      %s518 = scalar_lea.vmem %s4, 8
      %v519 = vld [vmem:[%s518] sm:$0xf]
      %520 = vrot.lane.b32.xlu0 %v402, 126
      %v521 = vpop.permute.xlu0 %520
      %522 = vrot.lane.b32.xlu0 %v403, 126
      %v523 = vpop.permute.xlu0 %522
      %524 = vrot.lane.b32.xlu0 %v404, 126
      %v525 = vpop.permute.xlu0 %524
      %vm526 = vcmask 1031168
      %v527 = vsel %vm526, %v521, %v523
      %v528 = vsel %vm526, %v523, %v525
      %v530 = vsel %vm414, %v519, 0
      %v533 = vsel %vm418, %v527, 0
      %v536 = vsel %vm418, %v528, 0
      %v539 = vsel %vm418, %v525, 0
      %541 = vmatpush.bf16.msra.mxu0 0
      %542 = vmatpush.bf16.msra.mxu0 0
      %543 = vmatpush.bf16.msra.mxu0 0
      %544 = vmatpush.bf16.msra.mxu0 0
      %545 = vmatpush.bf16.msra.mxu0 0
      %546 = vmatpush.bf16.msra.mxu0 0
      %547 = vmatpush.bf16.msra.mxu0 0
      %548 = vmatpush.bf16.msra.mxu0 %v533
      %549 = vmatmul.bf16.gmra.mxu0 %v530
      %v550 = vpop.f32.mrf.mxu0
      %v551 = vadd.f32 0.0, %v550
      %v552 = vpop.f32.mrf.mxu0
      %553 = vdwg.mxu0
      %554 = vmatpush.bf16.msra.mxu0 0
      %555 = vmatpush.bf16.msra.mxu0 0
      %556 = vmatpush.bf16.msra.mxu0 0
      %557 = vmatpush.bf16.msra.mxu0 0
      %558 = vmatpush.bf16.msra.mxu0 0
      %559 = vmatpush.bf16.msra.mxu0 0
      %560 = vmatpush.bf16.msra.mxu0 0
      %561 = vmatpush.bf16.msra.mxu0 %v536
      %562 = vmatmul.bf16.gmra.mxu0 %v530
      %v563 = vpop.f32.mrf.mxu0
      %v564 = vadd.f32 0.0, %v563
      %v565 = vpop.f32.mrf.mxu0
      %566 = vdwg.mxu0
      %567 = vmatpush.bf16.msra.mxu0 0
      %568 = vmatpush.bf16.msra.mxu0 0
      %569 = vmatpush.bf16.msra.mxu0 0
      %570 = vmatpush.bf16.msra.mxu0 0
      %571 = vmatpush.bf16.msra.mxu0 0
      %572 = vmatpush.bf16.msra.mxu0 0
      %573 = vmatpush.bf16.msra.mxu0 0
      %574 = vmatpush.bf16.msra.mxu0 %v539
      %575 = vmatmul.bf16.gmra.mxu0 %v530
      %v576 = vpop.f32.mrf.mxu0
      %v577 = vadd.f32 0.0, %v576
      %v578 = vpop.f32.mrf.mxu0
      %579 = vdwg.mxu0
      %v580 = vadd.f32 %v489, %v551
      %v581 = vadd.f32 %v502, %v564
      %v582 = vadd.f32 %v515, %v577
      %s583 = scalar_lea.vmem %s4, 12
      %v584 = vld [vmem:[%s583] sm:$0xf]
      %585 = vrot.lane.b32.xlu0 %v402, 110
      %v586 = vpop.permute.xlu0 %585
      %587 = vrot.lane.b32.xlu0 %v403, 110
      %v588 = vpop.permute.xlu0 %587
      %589 = vrot.lane.b32.xlu0 %v404, 110
      %v590 = vpop.permute.xlu0 %589
      %vm591 = vcmask 900096
      %v592 = vsel %vm591, %v586, %v588
      %v593 = vsel %vm591, %v588, %v590
      %v595 = vsel %vm414, %v584, 0
      %v598 = vsel %vm418, %v592, 0
      %v601 = vsel %vm418, %v593, 0
      %v604 = vsel %vm418, %v590, 0
      %606 = vmatpush.bf16.msra.mxu0 0
      %607 = vmatpush.bf16.msra.mxu0 0
      %608 = vmatpush.bf16.msra.mxu0 0
      %609 = vmatpush.bf16.msra.mxu0 0
      %610 = vmatpush.bf16.msra.mxu0 0
      %611 = vmatpush.bf16.msra.mxu0 0
      %612 = vmatpush.bf16.msra.mxu0 0
      %613 = vmatpush.bf16.msra.mxu0 %v598
      %614 = vmatmul.bf16.gmra.mxu0 %v595
      %v615 = vpop.f32.mrf.mxu0
      %v616 = vadd.f32 0.0, %v615
      %v617 = vpop.f32.mrf.mxu0
      %618 = vdwg.mxu0
      %619 = vmatpush.bf16.msra.mxu0 0
      %620 = vmatpush.bf16.msra.mxu0 0
      %621 = vmatpush.bf16.msra.mxu0 0
      %622 = vmatpush.bf16.msra.mxu0 0
      %623 = vmatpush.bf16.msra.mxu0 0
      %624 = vmatpush.bf16.msra.mxu0 0
      %625 = vmatpush.bf16.msra.mxu0 0
      %626 = vmatpush.bf16.msra.mxu0 %v601
      %627 = vmatmul.bf16.gmra.mxu0 %v595
      %v628 = vpop.f32.mrf.mxu0
      %v629 = vadd.f32 0.0, %v628
      %v630 = vpop.f32.mrf.mxu0
      %631 = vdwg.mxu0
      %632 = vmatpush.bf16.msra.mxu0 0
      %633 = vmatpush.bf16.msra.mxu0 0
      %634 = vmatpush.bf16.msra.mxu0 0
      %635 = vmatpush.bf16.msra.mxu0 0
      %636 = vmatpush.bf16.msra.mxu0 0
      %637 = vmatpush.bf16.msra.mxu0 0
      %638 = vmatpush.bf16.msra.mxu0 0
      %639 = vmatpush.bf16.msra.mxu0 %v604
      %640 = vmatmul.bf16.gmra.mxu0 %v595
      %v641 = vpop.f32.mrf.mxu0
      %v642 = vadd.f32 0.0, %v641
      %v643 = vpop.f32.mrf.mxu0
      %644 = vdwg.mxu0
      %v645 = vadd.f32 %v580, %v616
      %v646 = vadd.f32 %v581, %v629
      %v647 = vadd.f32 %v582, %v642
      %s648 = scalar_lea.vmem %s4, 16
      %v649 = vld [vmem:[%s648] sm:$0xf]
      %650 = vrot.lane.b32.xlu0 %v402, 109
      %v651 = vpop.permute.xlu0 %650
      %652 = vrot.lane.b32.xlu0 %v403, 109
      %v653 = vpop.permute.xlu0 %652
      %654 = vrot.lane.b32.xlu0 %v404, 109
      %v655 = vpop.permute.xlu0 %654
      %vm656 = vcmask 891904
      %v657 = vsel %vm656, %v651, %v653
      %v658 = vsel %vm656, %v653, %v655
      %v660 = vsel %vm414, %v649, 0
      %v663 = vsel %vm418, %v657, 0
      %v666 = vsel %vm418, %v658, 0
      %v669 = vsel %vm418, %v655, 0
      %671 = vmatpush.bf16.msra.mxu0 0
      %672 = vmatpush.bf16.msra.mxu0 0
      %673 = vmatpush.bf16.msra.mxu0 0
      %674 = vmatpush.bf16.msra.mxu0 0
      %675 = vmatpush.bf16.msra.mxu0 0
      %676 = vmatpush.bf16.msra.mxu0 0
      %677 = vmatpush.bf16.msra.mxu0 0
      %678 = vmatpush.bf16.msra.mxu0 %v663
      %679 = vmatmul.bf16.gmra.mxu0 %v660
      %v680 = vpop.f32.mrf.mxu0
      %v681 = vadd.f32 0.0, %v680
      %v682 = vpop.f32.mrf.mxu0
      %683 = vdwg.mxu0
      %684 = vmatpush.bf16.msra.mxu0 0
      %685 = vmatpush.bf16.msra.mxu0 0
      %686 = vmatpush.bf16.msra.mxu0 0
      %687 = vmatpush.bf16.msra.mxu0 0
      %688 = vmatpush.bf16.msra.mxu0 0
      %689 = vmatpush.bf16.msra.mxu0 0
      %690 = vmatpush.bf16.msra.mxu0 0
      %691 = vmatpush.bf16.msra.mxu0 %v666
      %692 = vmatmul.bf16.gmra.mxu0 %v660
      %v693 = vpop.f32.mrf.mxu0
      %v694 = vadd.f32 0.0, %v693
      %v695 = vpop.f32.mrf.mxu0
      %696 = vdwg.mxu0
      %697 = vmatpush.bf16.msra.mxu0 0
      %698 = vmatpush.bf16.msra.mxu0 0
      %699 = vmatpush.bf16.msra.mxu0 0
      %700 = vmatpush.bf16.msra.mxu0 0
      %701 = vmatpush.bf16.msra.mxu0 0
      %702 = vmatpush.bf16.msra.mxu0 0
      %703 = vmatpush.bf16.msra.mxu0 0
      %704 = vmatpush.bf16.msra.mxu0 %v669
      %705 = vmatmul.bf16.gmra.mxu0 %v660
      %v706 = vpop.f32.mrf.mxu0
      %v707 = vadd.f32 0.0, %v706
      %v708 = vpop.f32.mrf.mxu0
      %709 = vdwg.mxu0
      %v710 = vadd.f32 %v645, %v681
      %v711 = vadd.f32 %v646, %v694
      %v712 = vadd.f32 %v647, %v707
      %s713 = scalar_lea.vmem %s4, 20
      %v714 = vld [vmem:[%s713] sm:$0xf]
      %715 = vrot.lane.b32.xlu0 %v402, 108
      %v716 = vpop.permute.xlu0 %715
      %717 = vrot.lane.b32.xlu0 %v403, 108
      %v718 = vpop.permute.xlu0 %717
      %719 = vrot.lane.b32.xlu0 %v404, 108
      %v720 = vpop.permute.xlu0 %719
      %vm721 = vcmask 883712
      %v722 = vsel %vm721, %v716, %v718
      %v723 = vsel %vm721, %v718, %v720
      %v725 = vsel %vm414, %v714, 0
      %v728 = vsel %vm418, %v722, 0
      %v731 = vsel %vm418, %v723, 0
      %v734 = vsel %vm418, %v720, 0
      %736 = vmatpush.bf16.msra.mxu0 0
      %737 = vmatpush.bf16.msra.mxu0 0
      %738 = vmatpush.bf16.msra.mxu0 0
      %739 = vmatpush.bf16.msra.mxu0 0
      %740 = vmatpush.bf16.msra.mxu0 0
      %741 = vmatpush.bf16.msra.mxu0 0
      %742 = vmatpush.bf16.msra.mxu0 0
      %743 = vmatpush.bf16.msra.mxu0 %v728
      %744 = vmatmul.bf16.gmra.mxu0 %v725
      %v745 = vpop.f32.mrf.mxu0
      %v746 = vadd.f32 0.0, %v745
      %v747 = vpop.f32.mrf.mxu0
      %748 = vdwg.mxu0
      %749 = vmatpush.bf16.msra.mxu0 0
      %750 = vmatpush.bf16.msra.mxu0 0
      %751 = vmatpush.bf16.msra.mxu0 0
      %752 = vmatpush.bf16.msra.mxu0 0
      %753 = vmatpush.bf16.msra.mxu0 0
      %754 = vmatpush.bf16.msra.mxu0 0
      %755 = vmatpush.bf16.msra.mxu0 0
      %756 = vmatpush.bf16.msra.mxu0 %v731
      %757 = vmatmul.bf16.gmra.mxu0 %v725
      %v758 = vpop.f32.mrf.mxu0
      %v759 = vadd.f32 0.0, %v758
      %v760 = vpop.f32.mrf.mxu0
      %761 = vdwg.mxu0
      %762 = vmatpush.bf16.msra.mxu0 0
      %763 = vmatpush.bf16.msra.mxu0 0
      %764 = vmatpush.bf16.msra.mxu0 0
      %765 = vmatpush.bf16.msra.mxu0 0
      %766 = vmatpush.bf16.msra.mxu0 0
      %767 = vmatpush.bf16.msra.mxu0 0
      %768 = vmatpush.bf16.msra.mxu0 0
      %769 = vmatpush.bf16.msra.mxu0 %v734
      %770 = vmatmul.bf16.gmra.mxu0 %v725
      %v771 = vpop.f32.mrf.mxu0
      %v772 = vadd.f32 0.0, %v771
      %v773 = vpop.f32.mrf.mxu0
      %774 = vdwg.mxu0
      %v775 = vadd.f32 %v710, %v746
      %v776 = vadd.f32 %v711, %v759
      %v777 = vadd.f32 %v712, %v772
      %s778 = scalar_lea.vmem %s4, 24
      %v779 = vld [vmem:[%s778] sm:$0xf]
      %780 = vrot.lane.b32.xlu0 %v402, 92
      %v781 = vpop.permute.xlu0 %780
      %782 = vrot.lane.b32.xlu0 %v403, 92
      %v783 = vpop.permute.xlu0 %782
      %784 = vrot.lane.b32.xlu0 %v404, 92
      %v785 = vpop.permute.xlu0 %784
      %vm786 = vcmask 752640
      %v787 = vsel %vm786, %v781, %v783
      %v788 = vsel %vm786, %v783, %v785
      %v790 = vsel %vm414, %v779, 0
      %v793 = vsel %vm418, %v787, 0
      %v796 = vsel %vm418, %v788, 0
      %v799 = vsel %vm418, %v785, 0
      %801 = vmatpush.bf16.msra.mxu0 0
      %802 = vmatpush.bf16.msra.mxu0 0
      %803 = vmatpush.bf16.msra.mxu0 0
      %804 = vmatpush.bf16.msra.mxu0 0
      %805 = vmatpush.bf16.msra.mxu0 0
      %806 = vmatpush.bf16.msra.mxu0 0
      %807 = vmatpush.bf16.msra.mxu0 0
      %808 = vmatpush.bf16.msra.mxu0 %v793
      %809 = vmatmul.bf16.gmra.mxu0 %v790
      %v810 = vpop.f32.mrf.mxu0
      %v811 = vadd.f32 0.0, %v810
      %v812 = vpop.f32.mrf.mxu0
      %813 = vdwg.mxu0
      %814 = vmatpush.bf16.msra.mxu0 0
      %815 = vmatpush.bf16.msra.mxu0 0
      %816 = vmatpush.bf16.msra.mxu0 0
      %817 = vmatpush.bf16.msra.mxu0 0
      %818 = vmatpush.bf16.msra.mxu0 0
      %819 = vmatpush.bf16.msra.mxu0 0
      %820 = vmatpush.bf16.msra.mxu0 0
      %821 = vmatpush.bf16.msra.mxu0 %v796
      %822 = vmatmul.bf16.gmra.mxu0 %v790
      %v823 = vpop.f32.mrf.mxu0
      %v824 = vadd.f32 0.0, %v823
      %v825 = vpop.f32.mrf.mxu0
      %826 = vdwg.mxu0
      %827 = vmatpush.bf16.msra.mxu0 0
      %828 = vmatpush.bf16.msra.mxu0 0
      %829 = vmatpush.bf16.msra.mxu0 0
      %830 = vmatpush.bf16.msra.mxu0 0
      %831 = vmatpush.bf16.msra.mxu0 0
      %832 = vmatpush.bf16.msra.mxu0 0
      %833 = vmatpush.bf16.msra.mxu0 0
      %834 = vmatpush.bf16.msra.mxu0 %v799
      %835 = vmatmul.bf16.gmra.mxu0 %v790
      %v836 = vpop.f32.mrf.mxu0
      %v837 = vadd.f32 0.0, %v836
      %v838 = vpop.f32.mrf.mxu0
      %839 = vdwg.mxu0
      %v840 = vadd.f32 %v775, %v811
      %v841 = vadd.f32 %v776, %v824
      %v842 = vadd.f32 %v777, %v837
      %s843 = scalar_lea.vmem %s4, 28
      %v844 = vld [vmem:[%s843] sm:$0xf]
      %845 = vrot.lane.b32.xlu0 %v402, 91
      %v846 = vpop.permute.xlu0 %845
      %847 = vrot.lane.b32.xlu0 %v403, 91
      %v848 = vpop.permute.xlu0 %847
      %849 = vrot.lane.b32.xlu0 %v404, 91
      %v850 = vpop.permute.xlu0 %849
      %vm851 = vcmask 744448
      %v852 = vsel %vm851, %v846, %v848
      %v853 = vsel %vm851, %v848, %v850
      %v855 = vsel %vm414, %v844, 0
      %v858 = vsel %vm418, %v852, 0
      %v861 = vsel %vm418, %v853, 0
      %v864 = vsel %vm418, %v850, 0
      %866 = vmatpush.bf16.msra.mxu0 0
      %867 = vmatpush.bf16.msra.mxu0 0
      %868 = vmatpush.bf16.msra.mxu0 0
      %869 = vmatpush.bf16.msra.mxu0 0
      %870 = vmatpush.bf16.msra.mxu0 0
      %871 = vmatpush.bf16.msra.mxu0 0
      %872 = vmatpush.bf16.msra.mxu0 0
      %873 = vmatpush.bf16.msra.mxu0 %v858
      %874 = vmatmul.bf16.gmra.mxu0 %v855
      %v875 = vpop.f32.mrf.mxu0
      %v876 = vadd.f32 0.0, %v875
      %v877 = vpop.f32.mrf.mxu0
      %878 = vdwg.mxu0
      %879 = vmatpush.bf16.msra.mxu0 0
      %880 = vmatpush.bf16.msra.mxu0 0
      %881 = vmatpush.bf16.msra.mxu0 0
      %882 = vmatpush.bf16.msra.mxu0 0
      %883 = vmatpush.bf16.msra.mxu0 0
      %884 = vmatpush.bf16.msra.mxu0 0
      %885 = vmatpush.bf16.msra.mxu0 0
      %886 = vmatpush.bf16.msra.mxu0 %v861
      %887 = vmatmul.bf16.gmra.mxu0 %v855
      %v888 = vpop.f32.mrf.mxu0
      %v889 = vadd.f32 0.0, %v888
      %v890 = vpop.f32.mrf.mxu0
      %891 = vdwg.mxu0
      %892 = vmatpush.bf16.msra.mxu0 0
      %893 = vmatpush.bf16.msra.mxu0 0
      %894 = vmatpush.bf16.msra.mxu0 0
      %895 = vmatpush.bf16.msra.mxu0 0
      %896 = vmatpush.bf16.msra.mxu0 0
      %897 = vmatpush.bf16.msra.mxu0 0
      %898 = vmatpush.bf16.msra.mxu0 0
      %899 = vmatpush.bf16.msra.mxu0 %v864
      %900 = vmatmul.bf16.gmra.mxu0 %v855
      %v901 = vpop.f32.mrf.mxu0
      %v902 = vadd.f32 0.0, %v901
      %v903 = vpop.f32.mrf.mxu0
      %904 = vdwg.mxu0
      %v905 = vadd.f32 %v840, %v876
      %v906 = vadd.f32 %v841, %v889
      %v907 = vadd.f32 %v842, %v902
      %s908 = scalar_lea.vmem %s4, 32
      %v909 = vld [vmem:[%s908] sm:$0xf]
      %910 = vrot.lane.b32.xlu0 %v402, 90
      %v911 = vpop.permute.xlu0 %910
      %912 = vrot.lane.b32.xlu0 %v403, 90
      %v913 = vpop.permute.xlu0 %912
      %914 = vrot.lane.b32.xlu0 %v404, 90
      %v915 = vpop.permute.xlu0 %914
      %vm916 = vcmask 736256
      %v917 = vsel %vm916, %v911, %v913
      %v918 = vsel %vm916, %v913, %v915
      %v920 = vsel %vm414, %v909, 0
      %v923 = vsel %vm418, %v917, 0
      %v926 = vsel %vm418, %v918, 0
      %v929 = vsel %vm418, %v915, 0
      %931 = vmatpush.bf16.msra.mxu0 0
      %932 = vmatpush.bf16.msra.mxu0 0
      %933 = vmatpush.bf16.msra.mxu0 0
      %934 = vmatpush.bf16.msra.mxu0 0
      %935 = vmatpush.bf16.msra.mxu0 0
      %936 = vmatpush.bf16.msra.mxu0 0
      %937 = vmatpush.bf16.msra.mxu0 0
      %938 = vmatpush.bf16.msra.mxu0 %v923
      %939 = vmatmul.bf16.gmra.mxu0 %v920
      %v940 = vpop.f32.mrf.mxu0
      %v941 = vadd.f32 0.0, %v940
      %v942 = vpop.f32.mrf.mxu0
      %943 = vdwg.mxu0
      %944 = vmatpush.bf16.msra.mxu0 0
      %945 = vmatpush.bf16.msra.mxu0 0
      %946 = vmatpush.bf16.msra.mxu0 0
      %947 = vmatpush.bf16.msra.mxu0 0
      %948 = vmatpush.bf16.msra.mxu0 0
      %949 = vmatpush.bf16.msra.mxu0 0
      %950 = vmatpush.bf16.msra.mxu0 0
      %951 = vmatpush.bf16.msra.mxu0 %v926
      %952 = vmatmul.bf16.gmra.mxu0 %v920
      %v953 = vpop.f32.mrf.mxu0
      %v954 = vadd.f32 0.0, %v953
      %v955 = vpop.f32.mrf.mxu0
      %956 = vdwg.mxu0
      %957 = vmatpush.bf16.msra.mxu0 0
      %958 = vmatpush.bf16.msra.mxu0 0
      %959 = vmatpush.bf16.msra.mxu0 0
      %960 = vmatpush.bf16.msra.mxu0 0
      %961 = vmatpush.bf16.msra.mxu0 0
      %962 = vmatpush.bf16.msra.mxu0 0
      %963 = vmatpush.bf16.msra.mxu0 0
      %964 = vmatpush.bf16.msra.mxu0 %v929
      %965 = vmatmul.bf16.gmra.mxu0 %v920
      %v966 = vpop.f32.mrf.mxu0
      %v967 = vadd.f32 0.0, %v966
      %v968 = vpop.f32.mrf.mxu0
      %969 = vdwg.mxu0
      %v970 = vadd.f32 %v905, %v941
      %v971 = vadd.f32 %v906, %v954
      %v972 = vadd.f32 %v907, %v967
      %v973 = vmul.f32 %v970, %v363
      %v974 = vmul.f32 %v971, %v364
      %v975 = vmul.f32 %v972, %v365
      %v976 = vpack.c.bf16 %v974, %v973
      %v977 = vpack.c.bf16 %v975, %v975
      %978 = vst [vmem:[%s314] sm:$0xff] %v976
      %vm979 = vcmask 551936
      %980 = vst.msk [vmem:[%s314 + $0x8] sm:$0xf] %vm979, %v977
      %v981 = vld [vmem:[%s319] sm:$0xff]
      %v982 = vadd.f32 %v973, %v974
      %vm983 = vcmask 556032
      %v984 = vsel %vm983, %v975, 0.0
      %v985 = vadd.f32 %v982, %v984
      %986 = vadd.xlane.f32.xlu0 %v985
      %v987 = vpop.xlane.xlu0 %986
      %v988 = vadd.f32 %v981, %v987
      %vm989 = vcmask 7168
      %990 = vst.msk [vmem:[%s319] sm:$0xff] %vm989, %v988
      %v991 = vld [vmem:[%s323] sm:$0xff]
      %v992 = vmul.f32 %v973, %v973
      %v993 = vmul.f32 %v974, %v974
      %v994 = vmul.f32 %v975, %v975
      %v995 = vadd.f32 %v992, %v993
      %v996 = vsel %vm983, %v994, 0.0
      %v997 = vadd.f32 %v995, %v996
      %998 = vadd.xlane.f32.xlu0 %v997
      %v999 = vpop.xlane.xlu0 %998
      %v1000 = vadd.f32 %v991, %v999
      %1001 = vst.msk [vmem:[%s323] sm:$0xff] %vm989, %v1000
      %s1002 = sadd.s32 %s23, %s24
      %p1003 = scmp.lt.s32.totalorder %s1002, 1
      %s1004 = scalar_select %p1003, %s1002, 1
      %s1005 = smul.addr %s1004, 3
      %s1006 = smul.addr %s1005, 4
      %s1007 = scalar_lea.vmem %s5, %s1006
      %p1008 = scmp.lt.s32.totalorder %s23, 1
      %s1009 = scalar_select %p1008, %s23, 1
      %s1010 = smul.addr %s1009, 8
      %s1011 = scalar_lea.vmem %s6, %s1010
      %p1012 = scmp.lt.s32.totalorder %s23, 1
      %s1013 = scalar_select %p1012, %s23, 1
      %s1014 = smul.addr %s1013, 8
      %s1015 = scalar_lea.vmem %s7, %s1014
      // Predicated region
      $region45: #{resnet50_basic_block.5} parent=39 // pred_check
        %p1016 = pneg %p163
      $region46: #{resnet50_basic_block.5} parent=39 // pred_check_branch
        %1018 = sbr.rel (%p1016) target = $region48
      $region47: #{resnet50_basic_block.5} parent=39 // pred_region
        %s1019 = sadd.s32 %s23, %s24
      $region48: #{resnet50_basic_block.5} parent=39 // pred_fallthru
        _
      // Predicated region
      $region49: #{resnet50_basic_block.5} parent=39 // pred_check
        %p1020 = pneg %p189
      $region50: #{resnet50_basic_block.5} parent=39 // pred_check_branch
        %1022 = sbr.rel (%p1020) target = $region52
      $region51: #{resnet50_basic_block.5} parent=39 // pred_region
        _
      $region52: #{resnet50_basic_block.5} parent=39 // pred_fallthru
        _
      // Predicated region
      $region53: #{resnet50_basic_block.5} parent=39 // pred_check
        %p1023 = pneg %p215
      $region54: #{resnet50_basic_block.5} parent=39 // pred_check_branch
        %1025 = sbr.rel (%p1023) target = $region56
      $region55: #{resnet50_basic_block.5} parent=39 // pred_region
        _
      $region56: #{resnet50_basic_block.5} parent=39 // pred_fallthru
        _
    $region40: #{resnet50_basic_block.5} parent=5 // pred_fallthru
      _
    %p1026 = scmp.le.s32.totalorder 2, %s14
    // Predicated region
    $region57: #{resnet50_basic_block.5} parent=5 // pred_check
      %p1027 = pneg %p1026
    $region58: #{resnet50_basic_block.5} parent=5 // pred_check_branch
      %1029 = sbr.rel (%p1027) target = $region60
    $region59: #{resnet50_basic_block.5} parent=5 // pred_region
      %s1030 = ssub.s32 %s14, 2
      // Predicated region
      $region61: #{resnet50_basic_block.5} parent=59 // pred_check
        %p1031 = pneg %p169
      $region62: #{resnet50_basic_block.5} parent=59 // pred_check_branch
        %1033 = sbr.rel (%p1031) target = $region64
      $region63: #{resnet50_basic_block.5} parent=59 // pred_region
        %s1034 = sadd.s32 %s25, %s26
        %p1035 = scmp.lt.s32.totalorder %s1034, 1
        %s1036 = scalar_select %p1035, %s1034, 1
        %s1037 = smul.addr %s1036, 3
        %s1038 = smul.addr %s1037, 4
        %s1039 = scalar_lea.vmem %s5, %s1038
      $region64: #{resnet50_basic_block.5} parent=59 // pred_fallthru
        _
      // Predicated region
      $region65: #{resnet50_basic_block.5} parent=59 // pred_check
        %p1040 = pneg %p195
      $region66: #{resnet50_basic_block.5} parent=59 // pred_check_branch
        %1042 = sbr.rel (%p1040) target = $region68
      $region67: #{resnet50_basic_block.5} parent=59 // pred_region
        %p1043 = scmp.lt.s32.totalorder %s25, 1
        %s1044 = scalar_select %p1043, %s25, 1
        %s1045 = smul.addr %s1044, 8
        %s1046 = scalar_lea.vmem %s6, %s1045
      $region68: #{resnet50_basic_block.5} parent=59 // pred_fallthru
        _
      // Predicated region
      $region69: #{resnet50_basic_block.5} parent=59 // pred_check
        %p1047 = pneg %p221
      $region70: #{resnet50_basic_block.5} parent=59 // pred_check_branch
        %1049 = sbr.rel (%p1047) target = $region72
      $region71: #{resnet50_basic_block.5} parent=59 // pred_region
        %p1050 = scmp.lt.s32.totalorder %s25, 1
        %s1051 = scalar_select %p1050, %s25, 1
        %s1052 = smul.addr %s1051, 8
        %s1053 = scalar_lea.vmem %s7, %s1052
      $region72: #{resnet50_basic_block.5} parent=59 // pred_fallthru
        _
    $region60: #{resnet50_basic_block.5} parent=5 // pred_fallthru
      _
  $region6: #{resnet50_basic_block.5} parent=0 // loop_footer
    %s18 = sadd.s32 1, %s14
  $region7: #{resnet50_basic_block.5} parent=0 // loop_footer_branch
    %13 = sbr.rel target = $region3
  $region8: #{resnet50_basic_block.5} parent=0 // loop_exit
    _

</llo_original>
